<compile_context>
chip_gen: v7x
topology: tpu7x:2x2x1
jax: 0.10.0
libtpu: 0.0.40
codegen_flags: <defaults>
</compile_context>

<pallas_src>
import jax
import jax.numpy as jnp
from jax.experimental import pallas as pl
from jax.experimental.pallas import tpu as pltpu

INPUT_DIM = 2048
HIDDEN_DIM = 128
OUTPUT_DIM = 1


def _round_up(n, m):
    return ((n + m - 1) // m) * m


def _device_config():
    """Returns (max_tile_rows, vmem_limit_bytes, split_for_two_cores)."""
    try:
        kind = jax.devices()[0].device_kind.lower()
    except Exception:
        kind = ""
    if "v5" in kind or "v6" in kind:
        # 128 MiB physical VMEM, single TensorCore: big tiles amortize the ~0.35 us
        # per-grid-step overhead and track the HBM roofline with fewer, larger DMAs.
        return 2048, 100 << 20, False
    # v7x (64 MiB VMEM, 2 TensorCores) or unknown generation: conservative budget.
    # TB=1024 f32 x: 2 x 8 MiB double-buffer + 4 MiB bf16 copy + ~1 MiB weights/temps ~ 22 MiB.
    return 1024, 48 << 20, True


def _choose_batch_tile(bp, max_tile, two_cores, granule):
    """Row tile: multiple of `granule`, <= max_tile; even tile count on 2-TC parts."""
    if bp <= granule:
        return granule
    if not two_cores:
        return min(max_tile, _round_up(bp, granule))
    # Even number of tiles (>=2) so the "parallel" batch axis splits across both cores.
    pairs = pl.cdiv(bp, 2 * max_tile)
    tb = _round_up(pl.cdiv(bp, 2 * pairs), granule)
    return min(tb, max_tile)


def mlp_kernel(x_ref, w1_ref, b1_ref, w2_ref, b2_ref, w3_ref, b3_ref, o_ref):
    # x_ref: (TB, INPUT_DIM) f32 or bf16; w1/w2: (in, out) bf16; w3: (1, HIDDEN_DIM) bf16;
    # b1/b2: (1, HIDDEN_DIM) f32; b3: (1, 1) f32; o_ref: (TB, OUTPUT_DIM) f32.
    x = x_ref[...]
    if x.dtype != jnp.bfloat16:
        x = x.astype(jnp.bfloat16)  # f32 fallback: cast hides under the x DMA

    # fc1 + ReLU: bf16 MXU inputs, f32 accumulation; ReLU on the VPU in f32.
    h1 = jnp.dot(x, w1_ref[...], preferred_element_type=jnp.float32) + b1_ref[...]
    h1 = jnp.maximum(h1, 0.0)

    # fc2 + ReLU.
    h2 = jnp.dot(h1.astype(jnp.bfloat16), w2_ref[...],
                 preferred_element_type=jnp.float32) + b2_ref[...]
    h2 = jnp.maximum(h2, 0.0)

    # fc3 (output width 1): VPU mul + lane reduction instead of a 1-column MXU pass.
    w3 = w3_ref[...].astype(jnp.float32)                    # (1, HIDDEN_DIM), lane-dense
    out = jnp.sum(h2 * w3, axis=-1, keepdims=True) + b3_ref[...]
    o_ref[...] = out.astype(o_ref.dtype)


def _resident_spec(shape, single_buffer):
    # Constant index_map -> block stays VMEM-resident across all batch tiles.
    index_map = lambda i: (0,) * len(shape)
    if single_buffer:
        return pl.BlockSpec(shape, index_map, pipeline_mode=pl.Buffered(1))
    return pl.BlockSpec(shape, index_map)


def _build_call(tb, grid, bp, params, vmem_limit, cost, single_buffer):
    in_specs = [pl.BlockSpec((tb, INPUT_DIM), lambda i: (i, 0))]       # streamed x tiles
    for name in ("w1", "b1", "w2", "b2", "w3", "b3"):
        in_specs.append(_resident_spec(params[name].shape, single_buffer))
    return pl.pallas_call(
        mlp_kernel,
        out_shape=jax.ShapeDtypeStruct((bp, OUTPUT_DIM), jnp.float32),
        grid=grid,
        in_specs=in_specs,
        out_specs=pl.BlockSpec((tb, OUTPUT_DIM), lambda i: (i, 0)),
        compiler_params=pltpu.CompilerParams(
            dimension_semantics=("parallel",),   # batch tiles split across TensorCores
            vmem_limit_bytes=vmem_limit,
        ),
        cost_estimate=cost,
    )


def mlp_forward(x, params, *, batch_tile=None):
    """x: (B, INPUT_DIM) float32 or bfloat16. Returns (B, OUTPUT_DIM) float32."""
    B = x.shape[0]
    max_tile, vmem_limit, two_cores = _device_config()
    granule = 16 if x.dtype == jnp.bfloat16 else 8
    if batch_tile is not None:
        max_tile = _round_up(batch_tile, granule)

    Bp = _round_up(B, 8)                     # pad only to the sublane granule, never to TB
    if Bp != B:
        x = jnp.pad(x, ((0, Bp - B), (0, 0)))
    TB = _choose_batch_tile(Bp, max_tile, two_cores, granule)
    grid = (pl.cdiv(Bp, TB),)                # trailing tile may be ragged (rows independent)

    cost = pl.CostEstimate(
        flops=2 * B * (INPUT_DIM * HIDDEN_DIM + HIDDEN_DIM * HIDDEN_DIM
                       + HIDDEN_DIM * OUTPUT_DIM),
        transcendentals=0,
        bytes_accessed=(
            B * INPUT_DIM * x.dtype.itemsize                            # x stream
            + B * OUTPUT_DIM * 4                                        # output
            + (INPUT_DIM * HIDDEN_DIM + HIDDEN_DIM * HIDDEN_DIM
               + OUTPUT_DIM * HIDDEN_DIM) * 2                           # bf16 weights
            + (2 * HIDDEN_DIM + OUTPUT_DIM) * 4),                       # f32 biases
    )

    args = (x, params["w1"], params["b1"], params["w2"], params["b2"],
            params["w3"], params["b3"])
    try:
        out = _build_call(TB, grid, Bp, params, vmem_limit, cost, True)(*args)
    except Exception:
        # Fallback if this JAX build rejects single-buffered resident blocks.
        out = _build_call(TB, grid, Bp, params, vmem_limit, cost, False)(*args)
    return out[:B]


def init_params(key):
    """Deterministic init mimicking nn.Linear (uniform +/- 1/sqrt(fan_in)).

    w1/w2 stored transposed to (in, out) for x @ W on the MXU; w3 stored as the
    PyTorch-native (out, in) = (1, HIDDEN_DIM) lane-dense row for the VPU reduction.
    Weights are kept in bf16 in HBM; biases stay f32.
    """
    k1, k2, k3, k4, k5, k6 = jax.random.split(key, 6)

    def linear_t(kw, kb, fan_in, fan_out):
        bound = 1.0 / jnp.sqrt(float(fan_in))
        w = jax.random.uniform(kw, (fan_in, fan_out), jnp.float32, -bound, bound)
        b = jax.random.uniform(kb, (1, fan_out), jnp.float32, -bound, bound)
        return w.astype(jnp.bfloat16), b

    w1, b1 = linear_t(k1, k2, INPUT_DIM, HIDDEN_DIM)
    w2, b2 = linear_t(k3, k4, HIDDEN_DIM, HIDDEN_DIM)

    bound3 = 1.0 / jnp.sqrt(float(HIDDEN_DIM))
    w3 = jax.random.uniform(k5, (OUTPUT_DIM, HIDDEN_DIM), jnp.float32,
                            -bound3, bound3).astype(jnp.bfloat16)
    b3 = jax.random.uniform(k6, (1, OUTPUT_DIM), jnp.float32, -bound3, bound3)
    return {"w1": w1, "b1": b1, "w2": w2, "b2": b2, "w3": w3, "b3": b3}


def reference_forward(x, params):
    """Pure-JAX reference mirroring the kernel's dtype handling (bf16 MXU, f32 accum)."""
    h1 = jnp.dot(x.astype(jnp.bfloat16), params["w1"],
                 preferred_element_type=jnp.float32) + params["b1"]
    h1 = jnp.maximum(h1, 0.0)
    h2 = jnp.dot(h1.astype(jnp.bfloat16), params["w2"],
                 preferred_element_type=jnp.float32) + params["b2"]
    h2 = jnp.maximum(h2, 0.0)
    w3 = params["w3"].astype(jnp.float32)
    return jnp.sum(h2 * w3, axis=-1, keepdims=True) + params["b3"]


if __name__ == "__main__":
    key = jax.random.PRNGKey(0)
    kx, kp, kx2 = jax.random.split(key, 3)
    params = init_params(kp)

    # Small case from the spec: batch=2, f32 input (in-kernel bf16 cast path; tiny 8-row pad).
    B = 2
    x = jax.random.normal(kx, (B, INPUT_DIM), jnp.float32)
    out = jax.block_until_ready(mlp_forward(x, params))
    ref = reference_forward(x, params)
    assert out.shape == (B, OUTPUT_DIM)
    assert jnp.allclose(out, ref, atol=2e-3, rtol=2e-3), "f32-input path mismatch"

    # Multi-tile case with a bf16 x stream: exercises the halved x DMA, the ragged trailing
    # tile (no full-batch pad), resident weights across grid steps, and the even tile split
    # for two-TensorCore parts.
    B2 = 600
    x2 = jax.random.normal(kx2, (B2, INPUT_DIM), jnp.float32).astype(jnp.bfloat16)
    out2 = jax.block_until_ready(mlp_forward(x2, params))
    ref2 = reference_forward(x2, params)
    assert out2.shape == (B2, OUTPUT_DIM)
    assert jnp.allclose(out2, ref2, atol=2e-3, rtol=2e-3), "bf16-input path mismatch"

    print("KERNEL_OK")
</pallas_src>

<mosaic_0001>
module attributes {stable_mosaic.version = 11 : i64} {
  func.func @mlp_kernel(%arg0: i32, %arg1: memref<8x2048xf32, #tpu.memory_space<vmem>>, %arg2: memref<2048x128xbf16, #tpu.memory_space<vmem>>, %arg3: memref<1x128xf32, #tpu.memory_space<vmem>>, %arg4: memref<128x128xbf16, #tpu.memory_space<vmem>>, %arg5: memref<1x128xf32, #tpu.memory_space<vmem>>, %arg6: memref<1x128xbf16, #tpu.memory_space<vmem>>, %arg7: memref<1x1xf32, #tpu.memory_space<vmem>>, %arg8: memref<8x1xf32, #tpu.memory_space<vmem>>) attributes {dimension_semantics = [#tpu.dimension_semantics<parallel>], iteration_bounds = array<i64: 1>, scalar_prefetch = 0 : i64, scratch_operands = 0 : i64, tpu.core_type = #tpu.core_type<tc>, window_params = [{transform_indices = @transform_0, window_bounds = array<i64: 8, 2048>}, {pipeline_mode = #tpu.pipeline_mode<synchronous>, transform_indices = @transform_1, window_bounds = array<i64: 2048, 128>}, {pipeline_mode = #tpu.pipeline_mode<synchronous>, transform_indices = @transform_2, window_bounds = array<i64: 1, 128>}, {pipeline_mode = #tpu.pipeline_mode<synchronous>, transform_indices = @transform_3, window_bounds = array<i64: 128, 128>}, {pipeline_mode = #tpu.pipeline_mode<synchronous>, transform_indices = @transform_4, window_bounds = array<i64: 1, 128>}, {pipeline_mode = #tpu.pipeline_mode<synchronous>, transform_indices = @transform_5, window_bounds = array<i64: 1, 128>}, {pipeline_mode = #tpu.pipeline_mode<synchronous>, transform_indices = @transform_6, window_bounds = array<i64: 1, 1>}, {transform_indices = @transform_7, window_bounds = array<i64: 8, 1>}]} {
    %c0 = arith.constant 0 : index
    %c0_0 = arith.constant 0 : index
    %0 = vector.load %arg1[%c0, %c0_0] : memref<8x2048xf32, #tpu.memory_space<vmem>>, vector<8x2048xf32>
    %1 = arith.truncf %0 : vector<8x2048xf32> to vector<8x2048xbf16>
    %c0_1 = arith.constant 0 : index
    %c0_2 = arith.constant 0 : index
    %2 = vector.load %arg2[%c0_1, %c0_2] : memref<2048x128xbf16, #tpu.memory_space<vmem>>, vector<2048x128xbf16>
    %cst = arith.constant dense<0.000000e+00> : vector<8x128xf32>
    %3 = tpu.matmul %1, %2, %cst {dimension_numbers = #tpu.dot_dimension_numbers<[1], [0], [0], [1], [0, 0, 1, 1], [], []>} : vector<8x2048xbf16>, vector<2048x128xbf16>, vector<8x128xf32> -> vector<8x128xf32>
    %c0_3 = arith.constant 0 : index
    %c0_4 = arith.constant 0 : index
    %4 = vector.load %arg3[%c0_3, %c0_4] : memref<1x128xf32, #tpu.memory_space<vmem>>, vector<1x128xf32>
    %5 = vector.broadcast %4 : vector<1x128xf32> to vector<8x128xf32>
    %6 = arith.addf %3, %5 : vector<8x128xf32>
    %cst_5 = arith.constant 0.000000e+00 : f32
    %7 = vector.broadcast %cst_5 : f32 to vector<8x128xf32>
    %8 = arith.maximumf %6, %7 : vector<8x128xf32>
    %9 = arith.truncf %8 : vector<8x128xf32> to vector<8x128xbf16>
    %c0_6 = arith.constant 0 : index
    %c0_7 = arith.constant 0 : index
    %10 = vector.load %arg4[%c0_6, %c0_7] : memref<128x128xbf16, #tpu.memory_space<vmem>>, vector<128x128xbf16>
    %cst_8 = arith.constant dense<0.000000e+00> : vector<8x128xf32>
    %11 = tpu.matmul %9, %10, %cst_8 {dimension_numbers = #tpu.dot_dimension_numbers<[1], [0], [0], [1], [0, 0, 1, 1], [], []>} : vector<8x128xbf16>, vector<128x128xbf16>, vector<8x128xf32> -> vector<8x128xf32>
    %c0_9 = arith.constant 0 : index
    %c0_10 = arith.constant 0 : index
    %12 = vector.load %arg5[%c0_9, %c0_10] : memref<1x128xf32, #tpu.memory_space<vmem>>, vector<1x128xf32>
    %13 = vector.broadcast %12 : vector<1x128xf32> to vector<8x128xf32>
    %14 = arith.addf %11, %13 : vector<8x128xf32>
    %cst_11 = arith.constant 0.000000e+00 : f32
    %15 = vector.broadcast %cst_11 : f32 to vector<8x128xf32>
    %16 = arith.maximumf %14, %15 : vector<8x128xf32>
    %c0_12 = arith.constant 0 : index
    %c0_13 = arith.constant 0 : index
    %17 = vector.load %arg6[%c0_12, %c0_13] : memref<1x128xbf16, #tpu.memory_space<vmem>>, vector<1x128xbf16>
    %18 = arith.extf %17 : vector<1x128xbf16> to vector<1x128xf32>
    %19 = vector.broadcast %18 : vector<1x128xf32> to vector<8x128xf32>
    %20 = arith.mulf %16, %19 : vector<8x128xf32>
    %cst_14 = arith.constant dense<0.000000e+00> : vector<8xf32>
    %21 = vector.multi_reduction <add>, %20, %cst_14 [1] : vector<8x128xf32> to vector<8xf32>
    %22 = vector.shape_cast %21 : vector<8xf32> to vector<8x1xf32>
    %c0_15 = arith.constant 0 : index
    %c0_16 = arith.constant 0 : index
    %23 = vector.load %arg7[%c0_15, %c0_16] : memref<1x1xf32, #tpu.memory_space<vmem>>, vector<1x1xf32>
    %24 = vector.broadcast %23 : vector<1x1xf32> to vector<8x1xf32>
    %25 = arith.addf %22, %24 : vector<8x1xf32>
    %c0_17 = arith.constant 0 : index
    %c0_18 = arith.constant 0 : index
    %26 = vector.load %arg8[%c0_17, %c0_18] : memref<8x1xf32, #tpu.memory_space<vmem>>, vector<8x1xf32>
    tpu.vector_store %arg8[%c0_17, %c0_18], %25 {strides = array<i32>} : memref<8x1xf32, #tpu.memory_space<vmem>>, vector<8x1xf32>,
    return
  }
  func.func @transform_0(%arg0: i32) -> (i32, i32) {
    %c0_i32 = arith.constant 0 : i32
    %c0_i32_0 = arith.constant 0 : i32
    return %arg0, %c0_i32 : i32, i32
  }
  func.func @transform_1(%arg0: i32) -> (i32, i32) {
    %c0_i32 = arith.constant 0 : i32
    %c0_i32_0 = arith.constant 0 : i32
    %c0_i32_1 = arith.constant 0 : i32
    return %c0_i32, %c0_i32_0 : i32, i32
  }
  func.func @transform_2(%arg0: i32) -> (i32, i32) {
    %c0_i32 = arith.constant 0 : i32
    %c0_i32_0 = arith.constant 0 : i32
    %c0_i32_1 = arith.constant 0 : i32
    return %c0_i32, %c0_i32_0 : i32, i32
  }
  func.func @transform_3(%arg0: i32) -> (i32, i32) {
    %c0_i32 = arith.constant 0 : i32
    %c0_i32_0 = arith.constant 0 : i32
    %c0_i32_1 = arith.constant 0 : i32
    return %c0_i32, %c0_i32_0 : i32, i32
  }
  func.func @transform_4(%arg0: i32) -> (i32, i32) {
    %c0_i32 = arith.constant 0 : i32
    %c0_i32_0 = arith.constant 0 : i32
    %c0_i32_1 = arith.constant 0 : i32
    return %c0_i32, %c0_i32_0 : i32, i32
  }
  func.func @transform_5(%arg0: i32) -> (i32, i32) {
    %c0_i32 = arith.constant 0 : i32
    %c0_i32_0 = arith.constant 0 : i32
    %c0_i32_1 = arith.constant 0 : i32
    return %c0_i32, %c0_i32_0 : i32, i32
  }
  func.func @transform_6(%arg0: i32) -> (i32, i32) {
    %c0_i32 = arith.constant 0 : i32
    %c0_i32_0 = arith.constant 0 : i32
    %c0_i32_1 = arith.constant 0 : i32
    return %c0_i32, %c0_i32_0 : i32, i32
  }
  func.func @transform_7(%arg0: i32) -> (i32, i32) {
    %c0_i32 = arith.constant 0 : i32
    %c0_i32_0 = arith.constant 0 : i32
    return %arg0, %c0_i32 : i32, i32
  }
}

module attributes {stable_mosaic.version = 11 : i64} {
  func.func @mlp_kernel(%arg0: i32, %arg1: memref<8x2048xf32, #tpu.memory_space<vmem>>, %arg2: memref<2048x128xbf16, #tpu.memory_space<vmem>>, %arg3: memref<1x128xf32, #tpu.memory_space<vmem>>, %arg4: memref<128x128xbf16, #tpu.memory_space<vmem>>, %arg5: memref<1x128xf32, #tpu.memory_space<vmem>>, %arg6: memref<1x128xbf16, #tpu.memory_space<vmem>>, %arg7: memref<1x1xf32, #tpu.memory_space<vmem>>, %arg8: memref<8x1xf32, #tpu.memory_space<vmem>>) attributes {dimension_semantics = [#tpu.dimension_semantics<parallel>], iteration_bounds = array<i64: 1>, scalar_prefetch = 0 : i64, scratch_operands = 0 : i64, tpu.core_type = #tpu.core_type<tc>, window_params = [{transform_indices = @transform_0, window_bounds = array<i64: 8, 2048>}, {pipeline_mode = #tpu.pipeline_mode<synchronous>, transform_indices = @transform_1, window_bounds = array<i64: 2048, 128>}, {pipeline_mode = #tpu.pipeline_mode<synchronous>, transform_indices = @transform_2, window_bounds = array<i64: 1, 128>}, {pipeline_mode = #tpu.pipeline_mode<synchronous>, transform_indices = @transform_3, window_bounds = array<i64: 128, 128>}, {pipeline_mode = #tpu.pipeline_mode<synchronous>, transform_indices = @transform_4, window_bounds = array<i64: 1, 128>}, {pipeline_mode = #tpu.pipeline_mode<synchronous>, transform_indices = @transform_5, window_bounds = array<i64: 1, 128>}, {pipeline_mode = #tpu.pipeline_mode<synchronous>, transform_indices = @transform_6, window_bounds = array<i64: 1, 1>}, {transform_indices = @transform_7, window_bounds = array<i64: 8, 1>}]} {
    %c0 = arith.constant 0 : index
    %c0_0 = arith.constant 0 : index
    %0 = vector.load %arg1[%c0, %c0_0] : memref<8x2048xf32, #tpu.memory_space<vmem>>, vector<8x2048xf32>
    %1 = arith.truncf %0 : vector<8x2048xf32> to vector<8x2048xbf16>
    %c0_1 = arith.constant 0 : index
    %c0_2 = arith.constant 0 : index
    %2 = vector.load %arg2[%c0_1, %c0_2] : memref<2048x128xbf16, #tpu.memory_space<vmem>>, vector<2048x128xbf16>
    %cst = arith.constant dense<0.000000e+00> : vector<8x128xf32>
    %3 = tpu.matmul %1, %2, %cst {dimension_numbers = #tpu.dot_dimension_numbers<[1], [0], [0], [1], [0, 0, 1, 1], [], []>} : vector<8x2048xbf16>, vector<2048x128xbf16>, vector<8x128xf32> -> vector<8x128xf32>
    %c0_3 = arith.constant 0 : index
    %c0_4 = arith.constant 0 : index
    %4 = vector.load %arg3[%c0_3, %c0_4] : memref<1x128xf32, #tpu.memory_space<vmem>>, vector<1x128xf32>
    %5 = vector.broadcast %4 : vector<1x128xf32> to vector<8x128xf32>
    %6 = arith.addf %3, %5 : vector<8x128xf32>
    %cst_5 = arith.constant 0.000000e+00 : f32
    %7 = vector.broadcast %cst_5 : f32 to vector<8x128xf32>
    %8 = arith.maximumf %6, %7 : vector<8x128xf32>
    %9 = arith.truncf %8 : vector<8x128xf32> to vector<8x128xbf16>
    %c0_6 = arith.constant 0 : index
    %c0_7 = arith.constant 0 : index
    %10 = vector.load %arg4[%c0_6, %c0_7] : memref<128x128xbf16, #tpu.memory_space<vmem>>, vector<128x128xbf16>
    %cst_8 = arith.constant dense<0.000000e+00> : vector<8x128xf32>
    %11 = tpu.matmul %9, %10, %cst_8 {dimension_numbers = #tpu.dot_dimension_numbers<[1], [0], [0], [1], [0, 0, 1, 1], [], []>} : vector<8x128xbf16>, vector<128x128xbf16>, vector<8x128xf32> -> vector<8x128xf32>
    %c0_9 = arith.constant 0 : index
    %c0_10 = arith.constant 0 : index
    %12 = vector.load %arg5[%c0_9, %c0_10] : memref<1x128xf32, #tpu.memory_space<vmem>>, vector<1x128xf32>
    %13 = vector.broadcast %12 : vector<1x128xf32> to vector<8x128xf32>
    %14 = arith.addf %11, %13 : vector<8x128xf32>
    %cst_11 = arith.constant 0.000000e+00 : f32
    %15 = vector.broadcast %cst_11 : f32 to vector<8x128xf32>
    %16 = arith.maximumf %14, %15 : vector<8x128xf32>
    %c0_12 = arith.constant 0 : index
    %c0_13 = arith.constant 0 : index
    %17 = vector.load %arg6[%c0_12, %c0_13] : memref<1x128xbf16, #tpu.memory_space<vmem>>, vector<1x128xbf16>
    %18 = arith.extf %17 : vector<1x128xbf16> to vector<1x128xf32>
    %19 = vector.broadcast %18 : vector<1x128xf32> to vector<8x128xf32>
    %20 = arith.mulf %16, %19 : vector<8x128xf32>
    %cst_14 = arith.constant dense<0.000000e+00> : vector<8xf32>
    %21 = vector.multi_reduction <add>, %20, %cst_14 [1] : vector<8x128xf32> to vector<8xf32>
    %22 = vector.shape_cast %21 : vector<8xf32> to vector<8x1xf32>
    %c0_15 = arith.constant 0 : index
    %c0_16 = arith.constant 0 : index
    %23 = vector.load %arg7[%c0_15, %c0_16] : memref<1x1xf32, #tpu.memory_space<vmem>>, vector<1x1xf32>
    %24 = vector.broadcast %23 : vector<1x1xf32> to vector<8x1xf32>
    %25 = arith.addf %22, %24 : vector<8x1xf32>
    %c0_17 = arith.constant 0 : index
    %c0_18 = arith.constant 0 : index
    %26 = vector.load %arg8[%c0_17, %c0_18] : memref<8x1xf32, #tpu.memory_space<vmem>>, vector<8x1xf32>
    tpu.vector_store %arg8[%c0_17, %c0_18], %25 {strides = array<i32>} : memref<8x1xf32, #tpu.memory_space<vmem>>, vector<8x1xf32>,
    return
  }
  func.func @transform_0(%arg0: i32) -> (i32, i32) {
    %c0_i32 = arith.constant 0 : i32
    %c0_i32_0 = arith.constant 0 : i32
    return %arg0, %c0_i32 : i32, i32
  }
  func.func @transform_1(%arg0: i32) -> (i32, i32) {
    %c0_i32 = arith.constant 0 : i32
    %c0_i32_0 = arith.constant 0 : i32
    %c0_i32_1 = arith.constant 0 : i32
    return %c0_i32, %c0_i32_0 : i32, i32
  }
  func.func @transform_2(%arg0: i32) -> (i32, i32) {
    %c0_i32 = arith.constant 0 : i32
    %c0_i32_0 = arith.constant 0 : i32
    %c0_i32_1 = arith.constant 0 : i32
    return %c0_i32, %c0_i32_0 : i32, i32
  }
  func.func @transform_3(%arg0: i32) -> (i32, i32) {
    %c0_i32 = arith.constant 0 : i32
    %c0_i32_0 = arith.constant 0 : i32
    %c0_i32_1 = arith.constant 0 : i32
    return %c0_i32, %c0_i32_0 : i32, i32
  }
  func.func @transform_4(%arg0: i32) -> (i32, i32) {
    %c0_i32 = arith.constant 0 : i32
    %c0_i32_0 = arith.constant 0 : i32
    %c0_i32_1 = arith.constant 0 : i32
    return %c0_i32, %c0_i32_0 : i32, i32
  }
  func.func @transform_5(%arg0: i32) -> (i32, i32) {
    %c0_i32 = arith.constant 0 : i32
    %c0_i32_0 = arith.constant 0 : i32
    %c0_i32_1 = arith.constant 0 : i32
    return %c0_i32, %c0_i32_0 : i32, i32
  }
  func.func @transform_6(%arg0: i32) -> (i32, i32) {
    %c0_i32 = arith.constant 0 : i32
    %c0_i32_0 = arith.constant 0 : i32
    %c0_i32_1 = arith.constant 0 : i32
    return %c0_i32, %c0_i32_0 : i32, i32
  }
  func.func @transform_7(%arg0: i32) -> (i32, i32) {
    %c0_i32 = arith.constant 0 : i32
    %c0_i32_0 = arith.constant 0 : i32
    return %arg0, %c0_i32 : i32, i32
  }
}

</mosaic_0001>

<llo_original>
// kernel: tpu_custom_call.1
$region0: #{tpu_custom_call.1}
  #allocation0 [shape = 'u32[]', space=smem, size = 0x4, offset = 0x4, fixed_abs, tag = 'smem constant byte address 0x4 - core index']
  #allocation1 [shape = 'u32[144,128]{1,0:T(1,128)}', space=vmem, size = 0x12000, scoped, tag = 'internal scratch']
  #allocation2 [shape = 'f32[1,1]{1,0:T(1,128)S(1)}', space=vmem, size = 0x200, scoped, tag = 'scoped memory for tpu_custom_call.1']
  %s0 = inlined_call_operand.hbm [shape: f32[8,2048], index: 0, kind: input, shape index: {}]
  %s1 = inlined_call_operand.hbm [shape: bf16[2048,128], index: 1, kind: input, shape index: {}]
  %s2 = inlined_call_operand.vmem [shape: f32[1,128], index: 2, kind: input, shape index: {}]
  %s3 = inlined_call_operand.hbm [shape: bf16[128,128], index: 3, kind: input, shape index: {}]
  %s4 = inlined_call_operand.vmem [shape: f32[1,128], index: 4, kind: input, shape index: {}]
  %s5 = inlined_call_operand.vmem [shape: bf16[1,128], index: 5, kind: input, shape index: {}]
  %s6 = inlined_call_operand.<no memory space> [shape: f32[1,1], index: 6, kind: input, shape index: {}]
  %s7 = inlined_call_operand.vmem [shape: f32[8,1], index: 7, kind: output, shape index: {}]
  %s8 = sld [smem:[#allocation0]]
  $region50: #{tpu_custom_call.1} parent=0
    _
  %s10 = ssub.s32 1, %s8
  %s11 = scalar_select 0, %s10, %s8
  %v12 = vstv %s6
  %13 = vst [vmem:[#allocation2] sm:$0x1] %v12
  $region1: #{tpu_custom_call.1} parent=0
    #allocation3 [shape = 'u8[65536]{0}', space=vmem, size = 0x10000, scoped, tag = 'input window, operand 0, single buffered']
    #allocation4 [shape = 's32[1]{0}', space=sflag, size = 0x4, scoped, tag = 'scoped memory for tpu_custom_call.1']
    #allocation5 [shape = 'u8[524288]{0}', space=vmem, size = 0x80000, scoped, tag = 'input window, operand 1, single buffered']
    #allocation6 [shape = 's32[1]{0}', space=sflag, size = 0x4, scoped, tag = 'scoped memory for tpu_custom_call.1']
    #allocation7 [shape = 'u8[32768]{0}', space=vmem, size = 0x8000, scoped, tag = 'input window, operand 3, single buffered']
    %14 = vsyncpa [#allocation4], 0
    %15 = vsyncpa [#allocation6], 0
    // Predicated region
    $region2: #{tpu_custom_call.1} parent=1 // pred_check
      _
    $region3: #{tpu_custom_call.1} parent=1 // pred_check_branch
      %17 = sbr.rel (0) target = $region5
    $region4: #{tpu_custom_call.1} parent=1 // pred_region
      %s19 = ssub.s32 2048, 2048
      %20 = vsyncadd [#allocation4], %s19
      %s22 = sshll.u32 [#allocation3], 4
      %s23 = int_to_ptr.vmem [resolvable:$true] %s22
      %25 = dma.hbm_to_vmem [thread:$0]  %s0, 2048, %s23, [#allocation4]
    $region5: #{tpu_custom_call.1} parent=1 // pred_fallthru
      _
    // Predicated region
    $region6: #{tpu_custom_call.1} parent=1 // pred_check
      _
    $region7: #{tpu_custom_call.1} parent=1 // pred_check_branch
      %27 = sbr.rel (0) target = $region9
    $region8: #{tpu_custom_call.1} parent=1 // pred_region
      %s29 = ssub.s32 16384, 16384
      %30 = vsyncadd [#allocation6], %s29
      %s31 = sshll.u32 [#allocation5], 4
      %s32 = int_to_ptr.vmem [resolvable:$true] %s31
      %37 = dma.hbm_to_vmem [thread:$0]  %s1, 16384, %s32, [#allocation6], 64, 64, 4
    $region9: #{tpu_custom_call.1} parent=1 // pred_fallthru
      _
    // Predicated region
    $region10: #{tpu_custom_call.1} parent=1 // pred_check
      _
    $region11: #{tpu_custom_call.1} parent=1 // pred_check_branch
      %39 = sbr.rel (0) target = $region13
    $region12: #{tpu_custom_call.1} parent=1 // pred_region
      _
    $region13: #{tpu_custom_call.1} parent=1 // pred_fallthru
      _
    // Predicated region
    $region14: #{tpu_custom_call.1} parent=1 // pred_check
      _
    $region15: #{tpu_custom_call.1} parent=1 // pred_check_branch
      %41 = sbr.rel (0) target = $region17
    $region16: #{tpu_custom_call.1} parent=1 // pred_region
      %s43 = ssub.s32 1024, 1024
      %44 = vsyncadd [#allocation6], %s43
      %s45 = sshll.u32 [#allocation7], 4
      %s46 = int_to_ptr.vmem [resolvable:$true] %s45
      %51 = dma.hbm_to_vmem [thread:$0]  %s3, 1024, %s46, [#allocation6], 64, 64, 4
    $region17: #{tpu_custom_call.1} parent=1 // pred_fallthru
      _
    // Predicated region
    $region18: #{tpu_custom_call.1} parent=1 // pred_check
      _
    $region19: #{tpu_custom_call.1} parent=1 // pred_check_branch
      %53 = sbr.rel (0) target = $region21
    $region20: #{tpu_custom_call.1} parent=1 // pred_region
      _
    $region21: #{tpu_custom_call.1} parent=1 // pred_fallthru
      _
    // Predicated region
    $region22: #{tpu_custom_call.1} parent=1 // pred_check
      _
    $region23: #{tpu_custom_call.1} parent=1 // pred_check_branch
      %55 = sbr.rel (0) target = $region25
    $region24: #{tpu_custom_call.1} parent=1 // pred_region
      _
    $region25: #{tpu_custom_call.1} parent=1 // pred_fallthru
      _
    // Predicated region
    $region26: #{tpu_custom_call.1} parent=1 // pred_check
      _
    $region27: #{tpu_custom_call.1} parent=1 // pred_check_branch
      %57 = sbr.rel (0) target = $region29
    $region28: #{tpu_custom_call.1} parent=1 // pred_region
      _
    $region29: #{tpu_custom_call.1} parent=1 // pred_fallthru
      _
    // Predicated region
    $region30: #{tpu_custom_call.1} parent=1 // pred_check
      _
    $region31: #{tpu_custom_call.1} parent=1 // pred_check_branch
      %59 = sbr.rel (0) target = $region33
    $region32: #{tpu_custom_call.1} parent=1 // pred_region
      %60 = dma.done [#allocation4], 2048
    $region33: #{tpu_custom_call.1} parent=1 // pred_fallthru
      _
    // Predicated region
    $region34: #{tpu_custom_call.1} parent=1 // pred_check
      _
    $region35: #{tpu_custom_call.1} parent=1 // pred_check_branch
      %62 = sbr.rel (0) target = $region37
    $region36: #{tpu_custom_call.1} parent=1 // pred_region
      %63 = dma.done [#allocation6], 16384
    $region37: #{tpu_custom_call.1} parent=1 // pred_fallthru
      _
    // Predicated region
    $region38: #{tpu_custom_call.1} parent=1 // pred_check
      _
    $region39: #{tpu_custom_call.1} parent=1 // pred_check_branch
      %65 = sbr.rel (0) target = $region41
    $region40: #{tpu_custom_call.1} parent=1 // pred_region
      %66 = dma.done [#allocation6], 1024
    $region41: #{tpu_custom_call.1} parent=1 // pred_fallthru
      _
    %v68 = vld [vmem:[#allocation3] sm:$0xff]
    %v69 = vld [vmem:[#allocation3 + $0x8] sm:$0xff]
    %v70 = vld [vmem:[#allocation3 + $0x10] sm:$0xff]
    %v71 = vld [vmem:[#allocation3 + $0x18] sm:$0xff]
    %v72 = vld [vmem:[#allocation3 + $0x20] sm:$0xff]
    %v73 = vld [vmem:[#allocation3 + $0x28] sm:$0xff]
    %v74 = vld [vmem:[#allocation3 + $0x30] sm:$0xff]
    %v75 = vld [vmem:[#allocation3 + $0x38] sm:$0xff]
    %v76 = vld [vmem:[#allocation3 + $0x40] sm:$0xff]
    %v77 = vld [vmem:[#allocation3 + $0x48] sm:$0xff]
    %v78 = vld [vmem:[#allocation3 + $0x50] sm:$0xff]
    %v79 = vld [vmem:[#allocation3 + $0x58] sm:$0xff]
    %v80 = vld [vmem:[#allocation3 + $0x60] sm:$0xff]
    %v81 = vld [vmem:[#allocation3 + $0x68] sm:$0xff]
    %v82 = vld [vmem:[#allocation3 + $0x70] sm:$0xff]
    %v83 = vld [vmem:[#allocation3 + $0x78] sm:$0xff]
    %v84 = vpack.c.bf16 %v68, %v68
    %v85 = vpack.c.bf16 %v69, %v69
    %v86 = vpack.c.bf16 %v70, %v70
    %v87 = vpack.c.bf16 %v71, %v71
    %v88 = vpack.c.bf16 %v72, %v72
    %v89 = vpack.c.bf16 %v73, %v73
    %v90 = vpack.c.bf16 %v74, %v74
    %v91 = vpack.c.bf16 %v75, %v75
    %v92 = vpack.c.bf16 %v76, %v76
    %v93 = vpack.c.bf16 %v77, %v77
    %v94 = vpack.c.bf16 %v78, %v78
    %v95 = vpack.c.bf16 %v79, %v79
    %v96 = vpack.c.bf16 %v80, %v80
    %v97 = vpack.c.bf16 %v81, %v81
    %v98 = vpack.c.bf16 %v82, %v82
    %v99 = vpack.c.bf16 %v83, %v83
    %v100 = vld [vmem:[#allocation5] sm:$0xf]
    %v101 = vld [vmem:[#allocation5 + $0x4] sm:$0xf]
    %v102 = vld [vmem:[#allocation5 + $0x8] sm:$0xf]
    %v103 = vld [vmem:[#allocation5 + $0xc] sm:$0xf]
    %v104 = vld [vmem:[#allocation5 + $0x10] sm:$0xf]
    %v105 = vld [vmem:[#allocation5 + $0x14] sm:$0xf]
    %v106 = vld [vmem:[#allocation5 + $0x18] sm:$0xf]
    %v107 = vld [vmem:[#allocation5 + $0x1c] sm:$0xf]
    %v108 = vld [vmem:[#allocation5 + $0x20] sm:$0xf]
    %v109 = vld [vmem:[#allocation5 + $0x24] sm:$0xf]
    %v110 = vld [vmem:[#allocation5 + $0x28] sm:$0xf]
    %v111 = vld [vmem:[#allocation5 + $0x2c] sm:$0xf]
    %v112 = vld [vmem:[#allocation5 + $0x30] sm:$0xf]
    %v113 = vld [vmem:[#allocation5 + $0x34] sm:$0xf]
    %v114 = vld [vmem:[#allocation5 + $0x38] sm:$0xf]
    %v115 = vld [vmem:[#allocation5 + $0x3c] sm:$0xf]
    %v116 = vld [vmem:[#allocation5 + $0x40] sm:$0xf]
    %v117 = vld [vmem:[#allocation5 + $0x44] sm:$0xf]
    %v118 = vld [vmem:[#allocation5 + $0x48] sm:$0xf]
    %v119 = vld [vmem:[#allocation5 + $0x4c] sm:$0xf]
    %v120 = vld [vmem:[#allocation5 + $0x50] sm:$0xf]
    %v121 = vld [vmem:[#allocation5 + $0x54] sm:$0xf]
    %v122 = vld [vmem:[#allocation5 + $0x58] sm:$0xf]
    %v123 = vld [vmem:[#allocation5 + $0x5c] sm:$0xf]
    %v124 = vld [vmem:[#allocation5 + $0x60] sm:$0xf]
    %v125 = vld [vmem:[#allocation5 + $0x64] sm:$0xf]
    %v126 = vld [vmem:[#allocation5 + $0x68] sm:$0xf]
    %v127 = vld [vmem:[#allocation5 + $0x6c] sm:$0xf]
    %v128 = vld [vmem:[#allocation5 + $0x70] sm:$0xf]
    %v129 = vld [vmem:[#allocation5 + $0x74] sm:$0xf]
    %v130 = vld [vmem:[#allocation5 + $0x78] sm:$0xf]
    %v131 = vld [vmem:[#allocation5 + $0x7c] sm:$0xf]
    %v132 = vld [vmem:[#allocation5 + $0x80] sm:$0xf]
    %v133 = vld [vmem:[#allocation5 + $0x84] sm:$0xf]
    %v134 = vld [vmem:[#allocation5 + $0x88] sm:$0xf]
    %v135 = vld [vmem:[#allocation5 + $0x8c] sm:$0xf]
    %v136 = vld [vmem:[#allocation5 + $0x90] sm:$0xf]
    %v137 = vld [vmem:[#allocation5 + $0x94] sm:$0xf]
    %v138 = vld [vmem:[#allocation5 + $0x98] sm:$0xf]
    %v139 = vld [vmem:[#allocation5 + $0x9c] sm:$0xf]
    %v140 = vld [vmem:[#allocation5 + $0xa0] sm:$0xf]
    %v141 = vld [vmem:[#allocation5 + $0xa4] sm:$0xf]
    %v142 = vld [vmem:[#allocation5 + $0xa8] sm:$0xf]
    %v143 = vld [vmem:[#allocation5 + $0xac] sm:$0xf]
    %v144 = vld [vmem:[#allocation5 + $0xb0] sm:$0xf]
    %v145 = vld [vmem:[#allocation5 + $0xb4] sm:$0xf]
    %v146 = vld [vmem:[#allocation5 + $0xb8] sm:$0xf]
    %v147 = vld [vmem:[#allocation5 + $0xbc] sm:$0xf]
    %v148 = vld [vmem:[#allocation5 + $0xc0] sm:$0xf]
    %v149 = vld [vmem:[#allocation5 + $0xc4] sm:$0xf]
    %v150 = vld [vmem:[#allocation5 + $0xc8] sm:$0xf]
    %v151 = vld [vmem:[#allocation5 + $0xcc] sm:$0xf]
    %v152 = vld [vmem:[#allocation5 + $0xd0] sm:$0xf]
    %v153 = vld [vmem:[#allocation5 + $0xd4] sm:$0xf]
    %v154 = vld [vmem:[#allocation5 + $0xd8] sm:$0xf]
    %v155 = vld [vmem:[#allocation5 + $0xdc] sm:$0xf]
    %v156 = vld [vmem:[#allocation5 + $0xe0] sm:$0xf]
    %v157 = vld [vmem:[#allocation5 + $0xe4] sm:$0xf]
    %v158 = vld [vmem:[#allocation5 + $0xe8] sm:$0xf]
    %v159 = vld [vmem:[#allocation5 + $0xec] sm:$0xf]
    %v160 = vld [vmem:[#allocation5 + $0xf0] sm:$0xf]
    %v161 = vld [vmem:[#allocation5 + $0xf4] sm:$0xf]
    %v162 = vld [vmem:[#allocation5 + $0xf8] sm:$0xf]
    %v163 = vld [vmem:[#allocation5 + $0xfc] sm:$0xf]
    %v164 = vld [vmem:[#allocation5 + $0x100] sm:$0xf]
    %v165 = vld [vmem:[#allocation5 + $0x104] sm:$0xf]
    %v166 = vld [vmem:[#allocation5 + $0x108] sm:$0xf]
    %v167 = vld [vmem:[#allocation5 + $0x10c] sm:$0xf]
    %v168 = vld [vmem:[#allocation5 + $0x110] sm:$0xf]
    %v169 = vld [vmem:[#allocation5 + $0x114] sm:$0xf]
    %v170 = vld [vmem:[#allocation5 + $0x118] sm:$0xf]
    %v171 = vld [vmem:[#allocation5 + $0x11c] sm:$0xf]
    %v172 = vld [vmem:[#allocation5 + $0x120] sm:$0xf]
    %v173 = vld [vmem:[#allocation5 + $0x124] sm:$0xf]
    %v174 = vld [vmem:[#allocation5 + $0x128] sm:$0xf]
    %v175 = vld [vmem:[#allocation5 + $0x12c] sm:$0xf]
    %v176 = vld [vmem:[#allocation5 + $0x130] sm:$0xf]
    %v177 = vld [vmem:[#allocation5 + $0x134] sm:$0xf]
    %v178 = vld [vmem:[#allocation5 + $0x138] sm:$0xf]
    %v179 = vld [vmem:[#allocation5 + $0x13c] sm:$0xf]
    %v180 = vld [vmem:[#allocation5 + $0x140] sm:$0xf]
    %v181 = vld [vmem:[#allocation5 + $0x144] sm:$0xf]
    %v182 = vld [vmem:[#allocation5 + $0x148] sm:$0xf]
    %v183 = vld [vmem:[#allocation5 + $0x14c] sm:$0xf]
    %v184 = vld [vmem:[#allocation5 + $0x150] sm:$0xf]
    %v185 = vld [vmem:[#allocation5 + $0x154] sm:$0xf]
    %v186 = vld [vmem:[#allocation5 + $0x158] sm:$0xf]
    %v187 = vld [vmem:[#allocation5 + $0x15c] sm:$0xf]
    %v188 = vld [vmem:[#allocation5 + $0x160] sm:$0xf]
    %v189 = vld [vmem:[#allocation5 + $0x164] sm:$0xf]
    %v190 = vld [vmem:[#allocation5 + $0x168] sm:$0xf]
    %v191 = vld [vmem:[#allocation5 + $0x16c] sm:$0xf]
    %v192 = vld [vmem:[#allocation5 + $0x170] sm:$0xf]
    %v193 = vld [vmem:[#allocation5 + $0x174] sm:$0xf]
    %v194 = vld [vmem:[#allocation5 + $0x178] sm:$0xf]
    %v195 = vld [vmem:[#allocation5 + $0x17c] sm:$0xf]
    %v196 = vld [vmem:[#allocation5 + $0x180] sm:$0xf]
    %v197 = vld [vmem:[#allocation5 + $0x184] sm:$0xf]
    %v198 = vld [vmem:[#allocation5 + $0x188] sm:$0xf]
    %v199 = vld [vmem:[#allocation5 + $0x18c] sm:$0xf]
    %v200 = vld [vmem:[#allocation5 + $0x190] sm:$0xf]
    %v201 = vld [vmem:[#allocation5 + $0x194] sm:$0xf]
    %v202 = vld [vmem:[#allocation5 + $0x198] sm:$0xf]
    %v203 = vld [vmem:[#allocation5 + $0x19c] sm:$0xf]
    %v204 = vld [vmem:[#allocation5 + $0x1a0] sm:$0xf]
    %v205 = vld [vmem:[#allocation5 + $0x1a4] sm:$0xf]
    %v206 = vld [vmem:[#allocation5 + $0x1a8] sm:$0xf]
    %v207 = vld [vmem:[#allocation5 + $0x1ac] sm:$0xf]
    %v208 = vld [vmem:[#allocation5 + $0x1b0] sm:$0xf]
    %v209 = vld [vmem:[#allocation5 + $0x1b4] sm:$0xf]
    %v210 = vld [vmem:[#allocation5 + $0x1b8] sm:$0xf]
    %v211 = vld [vmem:[#allocation5 + $0x1bc] sm:$0xf]
    %v212 = vld [vmem:[#allocation5 + $0x1c0] sm:$0xf]
    %v213 = vld [vmem:[#allocation5 + $0x1c4] sm:$0xf]
    %v214 = vld [vmem:[#allocation5 + $0x1c8] sm:$0xf]
    %v215 = vld [vmem:[#allocation5 + $0x1cc] sm:$0xf]
    %v216 = vld [vmem:[#allocation5 + $0x1d0] sm:$0xf]
    %v217 = vld [vmem:[#allocation5 + $0x1d4] sm:$0xf]
    %v218 = vld [vmem:[#allocation5 + $0x1d8] sm:$0xf]
    %v219 = vld [vmem:[#allocation5 + $0x1dc] sm:$0xf]
    %v220 = vld [vmem:[#allocation5 + $0x1e0] sm:$0xf]
    %v221 = vld [vmem:[#allocation5 + $0x1e4] sm:$0xf]
    %v222 = vld [vmem:[#allocation5 + $0x1e8] sm:$0xf]
    %v223 = vld [vmem:[#allocation5 + $0x1ec] sm:$0xf]
    %v224 = vld [vmem:[#allocation5 + $0x1f0] sm:$0xf]
    %v225 = vld [vmem:[#allocation5 + $0x1f4] sm:$0xf]
    %v226 = vld [vmem:[#allocation5 + $0x1f8] sm:$0xf]
    %v227 = vld [vmem:[#allocation5 + $0x1fc] sm:$0xf]
    %v228 = vld [vmem:[#allocation5 + $0x200] sm:$0xf]
    %v229 = vld [vmem:[#allocation5 + $0x204] sm:$0xf]
    %v230 = vld [vmem:[#allocation5 + $0x208] sm:$0xf]
    %v231 = vld [vmem:[#allocation5 + $0x20c] sm:$0xf]
    %v232 = vld [vmem:[#allocation5 + $0x210] sm:$0xf]
    %v233 = vld [vmem:[#allocation5 + $0x214] sm:$0xf]
    %v234 = vld [vmem:[#allocation5 + $0x218] sm:$0xf]
    %v235 = vld [vmem:[#allocation5 + $0x21c] sm:$0xf]
    %v236 = vld [vmem:[#allocation5 + $0x220] sm:$0xf]
    %v237 = vld [vmem:[#allocation5 + $0x224] sm:$0xf]
    %v238 = vld [vmem:[#allocation5 + $0x228] sm:$0xf]
    %v239 = vld [vmem:[#allocation5 + $0x22c] sm:$0xf]
    %v240 = vld [vmem:[#allocation5 + $0x230] sm:$0xf]
    %v241 = vld [vmem:[#allocation5 + $0x234] sm:$0xf]
    %v242 = vld [vmem:[#allocation5 + $0x238] sm:$0xf]
    %v243 = vld [vmem:[#allocation5 + $0x23c] sm:$0xf]
    %v244 = vld [vmem:[#allocation5 + $0x240] sm:$0xf]
    %v245 = vld [vmem:[#allocation5 + $0x244] sm:$0xf]
    %v246 = vld [vmem:[#allocation5 + $0x248] sm:$0xf]
    %v247 = vld [vmem:[#allocation5 + $0x24c] sm:$0xf]
    %v248 = vld [vmem:[#allocation5 + $0x250] sm:$0xf]
    %v249 = vld [vmem:[#allocation5 + $0x254] sm:$0xf]
    %v250 = vld [vmem:[#allocation5 + $0x258] sm:$0xf]
    %v251 = vld [vmem:[#allocation5 + $0x25c] sm:$0xf]
    %v252 = vld [vmem:[#allocation5 + $0x260] sm:$0xf]
    %v253 = vld [vmem:[#allocation5 + $0x264] sm:$0xf]
    %v254 = vld [vmem:[#allocation5 + $0x268] sm:$0xf]
    %v255 = vld [vmem:[#allocation5 + $0x26c] sm:$0xf]
    %v256 = vld [vmem:[#allocation5 + $0x270] sm:$0xf]
    %v257 = vld [vmem:[#allocation5 + $0x274] sm:$0xf]
    %v258 = vld [vmem:[#allocation5 + $0x278] sm:$0xf]
    %v259 = vld [vmem:[#allocation5 + $0x27c] sm:$0xf]
    %v260 = vld [vmem:[#allocation5 + $0x280] sm:$0xf]
    %v261 = vld [vmem:[#allocation5 + $0x284] sm:$0xf]
    %v262 = vld [vmem:[#allocation5 + $0x288] sm:$0xf]
    %v263 = vld [vmem:[#allocation5 + $0x28c] sm:$0xf]
    %v264 = vld [vmem:[#allocation5 + $0x290] sm:$0xf]
    %v265 = vld [vmem:[#allocation5 + $0x294] sm:$0xf]
    %v266 = vld [vmem:[#allocation5 + $0x298] sm:$0xf]
    %v267 = vld [vmem:[#allocation5 + $0x29c] sm:$0xf]
    %v268 = vld [vmem:[#allocation5 + $0x2a0] sm:$0xf]
    %v269 = vld [vmem:[#allocation5 + $0x2a4] sm:$0xf]
    %v270 = vld [vmem:[#allocation5 + $0x2a8] sm:$0xf]
    %v271 = vld [vmem:[#allocation5 + $0x2ac] sm:$0xf]
    %v272 = vld [vmem:[#allocation5 + $0x2b0] sm:$0xf]
    %v273 = vld [vmem:[#allocation5 + $0x2b4] sm:$0xf]
    %v274 = vld [vmem:[#allocation5 + $0x2b8] sm:$0xf]
    %v275 = vld [vmem:[#allocation5 + $0x2bc] sm:$0xf]
    %v276 = vld [vmem:[#allocation5 + $0x2c0] sm:$0xf]
    %v277 = vld [vmem:[#allocation5 + $0x2c4] sm:$0xf]
    %v278 = vld [vmem:[#allocation5 + $0x2c8] sm:$0xf]
    %v279 = vld [vmem:[#allocation5 + $0x2cc] sm:$0xf]
    %v280 = vld [vmem:[#allocation5 + $0x2d0] sm:$0xf]
    %v281 = vld [vmem:[#allocation5 + $0x2d4] sm:$0xf]
    %v282 = vld [vmem:[#allocation5 + $0x2d8] sm:$0xf]
    %v283 = vld [vmem:[#allocation5 + $0x2dc] sm:$0xf]
    %v284 = vld [vmem:[#allocation5 + $0x2e0] sm:$0xf]
    %v285 = vld [vmem:[#allocation5 + $0x2e4] sm:$0xf]
    %v286 = vld [vmem:[#allocation5 + $0x2e8] sm:$0xf]
    %v287 = vld [vmem:[#allocation5 + $0x2ec] sm:$0xf]
    %v288 = vld [vmem:[#allocation5 + $0x2f0] sm:$0xf]
    %v289 = vld [vmem:[#allocation5 + $0x2f4] sm:$0xf]
    %v290 = vld [vmem:[#allocation5 + $0x2f8] sm:$0xf]
    %v291 = vld [vmem:[#allocation5 + $0x2fc] sm:$0xf]
    %v292 = vld [vmem:[#allocation5 + $0x300] sm:$0xf]
    %v293 = vld [vmem:[#allocation5 + $0x304] sm:$0xf]
    %v294 = vld [vmem:[#allocation5 + $0x308] sm:$0xf]
    %v295 = vld [vmem:[#allocation5 + $0x30c] sm:$0xf]
    %v296 = vld [vmem:[#allocation5 + $0x310] sm:$0xf]
    %v297 = vld [vmem:[#allocation5 + $0x314] sm:$0xf]
    %v298 = vld [vmem:[#allocation5 + $0x318] sm:$0xf]
    %v299 = vld [vmem:[#allocation5 + $0x31c] sm:$0xf]
    %v300 = vld [vmem:[#allocation5 + $0x320] sm:$0xf]
    %v301 = vld [vmem:[#allocation5 + $0x324] sm:$0xf]
    %v302 = vld [vmem:[#allocation5 + $0x328] sm:$0xf]
    %v303 = vld [vmem:[#allocation5 + $0x32c] sm:$0xf]
    %v304 = vld [vmem:[#allocation5 + $0x330] sm:$0xf]
    %v305 = vld [vmem:[#allocation5 + $0x334] sm:$0xf]
    %v306 = vld [vmem:[#allocation5 + $0x338] sm:$0xf]
    %v307 = vld [vmem:[#allocation5 + $0x33c] sm:$0xf]
    %v308 = vld [vmem:[#allocation5 + $0x340] sm:$0xf]
    %v309 = vld [vmem:[#allocation5 + $0x344] sm:$0xf]
    %v310 = vld [vmem:[#allocation5 + $0x348] sm:$0xf]
    %v311 = vld [vmem:[#allocation5 + $0x34c] sm:$0xf]
    %v312 = vld [vmem:[#allocation5 + $0x350] sm:$0xf]
    %v313 = vld [vmem:[#allocation5 + $0x354] sm:$0xf]
    %v314 = vld [vmem:[#allocation5 + $0x358] sm:$0xf]
    %v315 = vld [vmem:[#allocation5 + $0x35c] sm:$0xf]
    %v316 = vld [vmem:[#allocation5 + $0x360] sm:$0xf]
    %v317 = vld [vmem:[#allocation5 + $0x364] sm:$0xf]
    %v318 = vld [vmem:[#allocation5 + $0x368] sm:$0xf]
    %v319 = vld [vmem:[#allocation5 + $0x36c] sm:$0xf]
    %v320 = vld [vmem:[#allocation5 + $0x370] sm:$0xf]
    %v321 = vld [vmem:[#allocation5 + $0x374] sm:$0xf]
    %v322 = vld [vmem:[#allocation5 + $0x378] sm:$0xf]
    %v323 = vld [vmem:[#allocation5 + $0x37c] sm:$0xf]
    %v324 = vld [vmem:[#allocation5 + $0x380] sm:$0xf]
    %v325 = vld [vmem:[#allocation5 + $0x384] sm:$0xf]
    %v326 = vld [vmem:[#allocation5 + $0x388] sm:$0xf]
    %v327 = vld [vmem:[#allocation5 + $0x38c] sm:$0xf]
    %v328 = vld [vmem:[#allocation5 + $0x390] sm:$0xf]
    %v329 = vld [vmem:[#allocation5 + $0x394] sm:$0xf]
    %v330 = vld [vmem:[#allocation5 + $0x398] sm:$0xf]
    %v331 = vld [vmem:[#allocation5 + $0x39c] sm:$0xf]
    %v332 = vld [vmem:[#allocation5 + $0x3a0] sm:$0xf]
    %v333 = vld [vmem:[#allocation5 + $0x3a4] sm:$0xf]
    %v334 = vld [vmem:[#allocation5 + $0x3a8] sm:$0xf]
    %v335 = vld [vmem:[#allocation5 + $0x3ac] sm:$0xf]
    %v336 = vld [vmem:[#allocation5 + $0x3b0] sm:$0xf]
    %v337 = vld [vmem:[#allocation5 + $0x3b4] sm:$0xf]
    %v338 = vld [vmem:[#allocation5 + $0x3b8] sm:$0xf]
    %v339 = vld [vmem:[#allocation5 + $0x3bc] sm:$0xf]
    %v340 = vld [vmem:[#allocation5 + $0x3c0] sm:$0xf]
    %v341 = vld [vmem:[#allocation5 + $0x3c4] sm:$0xf]
    %v342 = vld [vmem:[#allocation5 + $0x3c8] sm:$0xf]
    %v343 = vld [vmem:[#allocation5 + $0x3cc] sm:$0xf]
    %v344 = vld [vmem:[#allocation5 + $0x3d0] sm:$0xf]
    %v345 = vld [vmem:[#allocation5 + $0x3d4] sm:$0xf]
    %v346 = vld [vmem:[#allocation5 + $0x3d8] sm:$0xf]
    %v347 = vld [vmem:[#allocation5 + $0x3dc] sm:$0xf]
    %v348 = vld [vmem:[#allocation5 + $0x3e0] sm:$0xf]
    %v349 = vld [vmem:[#allocation5 + $0x3e4] sm:$0xf]
    %v350 = vld [vmem:[#allocation5 + $0x3e8] sm:$0xf]
    %v351 = vld [vmem:[#allocation5 + $0x3ec] sm:$0xf]
    %v352 = vld [vmem:[#allocation5 + $0x3f0] sm:$0xf]
    %v353 = vld [vmem:[#allocation5 + $0x3f4] sm:$0xf]
    %v354 = vld [vmem:[#allocation5 + $0x3f8] sm:$0xf]
    %v355 = vld [vmem:[#allocation5 + $0x3fc] sm:$0xf]
    %v356 = vld [vmem:[%s2] sm:$0x1]
    %v358 = vlaneseq
    %v359 = vshrl.u32 %v358, 7
    %v360 = vsub.s32 0, %v359
    %v361 = vrot.slane %v356, %v360
    %v619 = vunpack.c.l.b16 %v100
    %v620 = vunpack.c.l.b16 %v101
    %v621 = vunpack.c.l.b16 %v102
    %v622 = vunpack.c.l.b16 %v103
    %v623 = vunpack.c.l.b16 %v104
    %v624 = vunpack.c.l.b16 %v105
    %v625 = vunpack.c.l.b16 %v106
    %v626 = vunpack.c.l.b16 %v107
    %v627 = vunpack.c.l.b16 %v108
    %v628 = vunpack.c.l.b16 %v109
    %v629 = vunpack.c.l.b16 %v110
    %v630 = vunpack.c.l.b16 %v111
    %v631 = vunpack.c.l.b16 %v112
    %v632 = vunpack.c.l.b16 %v113
    %v633 = vunpack.c.l.b16 %v114
    %v634 = vunpack.c.l.b16 %v115
    %v635 = vunpack.c.l.b16 %v116
    %v636 = vunpack.c.l.b16 %v117
    %v637 = vunpack.c.l.b16 %v118
    %v638 = vunpack.c.l.b16 %v119
    %v639 = vunpack.c.l.b16 %v120
    %v640 = vunpack.c.l.b16 %v121
    %v641 = vunpack.c.l.b16 %v122
    %v642 = vunpack.c.l.b16 %v123
    %v643 = vunpack.c.l.b16 %v124
    %v644 = vunpack.c.l.b16 %v125
    %v645 = vunpack.c.l.b16 %v126
    %v646 = vunpack.c.l.b16 %v127
    %v647 = vunpack.c.l.b16 %v128
    %v648 = vunpack.c.l.b16 %v129
    %v649 = vunpack.c.l.b16 %v130
    %v650 = vunpack.c.l.b16 %v131
    %v651 = vunpack.c.l.b16 %v132
    %v652 = vunpack.c.l.b16 %v133
    %v653 = vunpack.c.l.b16 %v134
    %v654 = vunpack.c.l.b16 %v135
    %v655 = vunpack.c.l.b16 %v136
    %v656 = vunpack.c.l.b16 %v137
    %v657 = vunpack.c.l.b16 %v138
    %v658 = vunpack.c.l.b16 %v139
    %v659 = vunpack.c.l.b16 %v140
    %v660 = vunpack.c.l.b16 %v141
    %v661 = vunpack.c.l.b16 %v142
    %v662 = vunpack.c.l.b16 %v143
    %v663 = vunpack.c.l.b16 %v144
    %v664 = vunpack.c.l.b16 %v145
    %v665 = vunpack.c.l.b16 %v146
    %v666 = vunpack.c.l.b16 %v147
    %v667 = vunpack.c.l.b16 %v148
    %v668 = vunpack.c.l.b16 %v149
    %v669 = vunpack.c.l.b16 %v150
    %v670 = vunpack.c.l.b16 %v151
    %v671 = vunpack.c.l.b16 %v152
    %v672 = vunpack.c.l.b16 %v153
    %v673 = vunpack.c.l.b16 %v154
    %v674 = vunpack.c.l.b16 %v155
    %v675 = vunpack.c.l.b16 %v156
    %v676 = vunpack.c.l.b16 %v157
    %v677 = vunpack.c.l.b16 %v158
    %v678 = vunpack.c.l.b16 %v159
    %v679 = vunpack.c.l.b16 %v160
    %v680 = vunpack.c.l.b16 %v161
    %v681 = vunpack.c.l.b16 %v162
    %v682 = vunpack.c.l.b16 %v163
    %v683 = vunpack.c.l.b16 %v164
    %v684 = vunpack.c.l.b16 %v165
    %v685 = vunpack.c.l.b16 %v166
    %v686 = vunpack.c.l.b16 %v167
    %v687 = vunpack.c.l.b16 %v168
    %v688 = vunpack.c.l.b16 %v169
    %v689 = vunpack.c.l.b16 %v170
    %v690 = vunpack.c.l.b16 %v171
    %v691 = vunpack.c.l.b16 %v172
    %v692 = vunpack.c.l.b16 %v173
    %v693 = vunpack.c.l.b16 %v174
    %v694 = vunpack.c.l.b16 %v175
    %v695 = vunpack.c.l.b16 %v176
    %v696 = vunpack.c.l.b16 %v177
    %v697 = vunpack.c.l.b16 %v178
    %v698 = vunpack.c.l.b16 %v179
    %v699 = vunpack.c.l.b16 %v180
    %v700 = vunpack.c.l.b16 %v181
    %v701 = vunpack.c.l.b16 %v182
    %v702 = vunpack.c.l.b16 %v183
    %v703 = vunpack.c.l.b16 %v184
    %v704 = vunpack.c.l.b16 %v185
    %v705 = vunpack.c.l.b16 %v186
    %v706 = vunpack.c.l.b16 %v187
    %v707 = vunpack.c.l.b16 %v188
    %v708 = vunpack.c.l.b16 %v189
    %v709 = vunpack.c.l.b16 %v190
    %v710 = vunpack.c.l.b16 %v191
    %v711 = vunpack.c.l.b16 %v192
    %v712 = vunpack.c.l.b16 %v193
    %v713 = vunpack.c.l.b16 %v194
    %v714 = vunpack.c.l.b16 %v195
    %v715 = vunpack.c.l.b16 %v196
    %v716 = vunpack.c.l.b16 %v197
    %v717 = vunpack.c.l.b16 %v198
    %v718 = vunpack.c.l.b16 %v199
    %v719 = vunpack.c.l.b16 %v200
    %v720 = vunpack.c.l.b16 %v201
    %v721 = vunpack.c.l.b16 %v202
    %v722 = vunpack.c.l.b16 %v203
    %v723 = vunpack.c.l.b16 %v204
    %v724 = vunpack.c.l.b16 %v205
    %v725 = vunpack.c.l.b16 %v206
    %v726 = vunpack.c.l.b16 %v207
    %v727 = vunpack.c.l.b16 %v208
    %v728 = vunpack.c.l.b16 %v209
    %v729 = vunpack.c.l.b16 %v210
    %v730 = vunpack.c.l.b16 %v211
    %v731 = vunpack.c.l.b16 %v212
    %v732 = vunpack.c.l.b16 %v213
    %v733 = vunpack.c.l.b16 %v214
    %v734 = vunpack.c.l.b16 %v215
    %v735 = vunpack.c.l.b16 %v216
    %v736 = vunpack.c.l.b16 %v217
    %v737 = vunpack.c.l.b16 %v218
    %v738 = vunpack.c.l.b16 %v219
    %v739 = vunpack.c.l.b16 %v220
    %v740 = vunpack.c.l.b16 %v221
    %v741 = vunpack.c.l.b16 %v222
    %v742 = vunpack.c.l.b16 %v223
    %v743 = vunpack.c.l.b16 %v224
    %v744 = vunpack.c.l.b16 %v225
    %v745 = vunpack.c.l.b16 %v226
    %v746 = vunpack.c.l.b16 %v227
    %v747 = vunpack.c.l.b16 %v228
    %v748 = vunpack.c.l.b16 %v229
    %v749 = vunpack.c.l.b16 %v230
    %v750 = vunpack.c.l.b16 %v231
    %v751 = vunpack.c.l.b16 %v232
    %v752 = vunpack.c.l.b16 %v233
    %v753 = vunpack.c.l.b16 %v234
    %v754 = vunpack.c.l.b16 %v235
    %v755 = vunpack.c.l.b16 %v236
    %v756 = vunpack.c.l.b16 %v237
    %v757 = vunpack.c.l.b16 %v238
    %v758 = vunpack.c.l.b16 %v239
    %v759 = vunpack.c.l.b16 %v240
    %v760 = vunpack.c.l.b16 %v241
    %v761 = vunpack.c.l.b16 %v242
    %v762 = vunpack.c.l.b16 %v243
    %v763 = vunpack.c.l.b16 %v244
    %v764 = vunpack.c.l.b16 %v245
    %v765 = vunpack.c.l.b16 %v246
    %v766 = vunpack.c.l.b16 %v247
    %v767 = vunpack.c.l.b16 %v248
    %v768 = vunpack.c.l.b16 %v249
    %v769 = vunpack.c.l.b16 %v250
    %v770 = vunpack.c.l.b16 %v251
    %v771 = vunpack.c.l.b16 %v252
    %v772 = vunpack.c.l.b16 %v253
    %v773 = vunpack.c.l.b16 %v254
    %v774 = vunpack.c.l.b16 %v255
    %v775 = vunpack.c.l.b16 %v256
    %v776 = vunpack.c.l.b16 %v257
    %v777 = vunpack.c.l.b16 %v258
    %v778 = vunpack.c.l.b16 %v259
    %v779 = vunpack.c.l.b16 %v260
    %v780 = vunpack.c.l.b16 %v261
    %v781 = vunpack.c.l.b16 %v262
    %v782 = vunpack.c.l.b16 %v263
    %v783 = vunpack.c.l.b16 %v264
    %v784 = vunpack.c.l.b16 %v265
    %v785 = vunpack.c.l.b16 %v266
    %v786 = vunpack.c.l.b16 %v267
    %v787 = vunpack.c.l.b16 %v268
    %v788 = vunpack.c.l.b16 %v269
    %v789 = vunpack.c.l.b16 %v270
    %v790 = vunpack.c.l.b16 %v271
    %v791 = vunpack.c.l.b16 %v272
    %v792 = vunpack.c.l.b16 %v273
    %v793 = vunpack.c.l.b16 %v274
    %v794 = vunpack.c.l.b16 %v275
    %v795 = vunpack.c.l.b16 %v276
    %v796 = vunpack.c.l.b16 %v277
    %v797 = vunpack.c.l.b16 %v278
    %v798 = vunpack.c.l.b16 %v279
    %v799 = vunpack.c.l.b16 %v280
    %v800 = vunpack.c.l.b16 %v281
    %v801 = vunpack.c.l.b16 %v282
    %v802 = vunpack.c.l.b16 %v283
    %v803 = vunpack.c.l.b16 %v284
    %v804 = vunpack.c.l.b16 %v285
    %v805 = vunpack.c.l.b16 %v286
    %v806 = vunpack.c.l.b16 %v287
    %v807 = vunpack.c.l.b16 %v288
    %v808 = vunpack.c.l.b16 %v289
    %v809 = vunpack.c.l.b16 %v290
    %v810 = vunpack.c.l.b16 %v291
    %v811 = vunpack.c.l.b16 %v292
    %v812 = vunpack.c.l.b16 %v293
    %v813 = vunpack.c.l.b16 %v294
    %v814 = vunpack.c.l.b16 %v295
    %v815 = vunpack.c.l.b16 %v296
    %v816 = vunpack.c.l.b16 %v297
    %v817 = vunpack.c.l.b16 %v298
    %v818 = vunpack.c.l.b16 %v299
    %v819 = vunpack.c.l.b16 %v300
    %v820 = vunpack.c.l.b16 %v301
    %v821 = vunpack.c.l.b16 %v302
    %v822 = vunpack.c.l.b16 %v303
    %v823 = vunpack.c.l.b16 %v304
    %v824 = vunpack.c.l.b16 %v305
    %v825 = vunpack.c.l.b16 %v306
    %v826 = vunpack.c.l.b16 %v307
    %v827 = vunpack.c.l.b16 %v308
    %v828 = vunpack.c.l.b16 %v309
    %v829 = vunpack.c.l.b16 %v310
    %v830 = vunpack.c.l.b16 %v311
    %v831 = vunpack.c.l.b16 %v312
    %v832 = vunpack.c.l.b16 %v313
    %v833 = vunpack.c.l.b16 %v314
    %v834 = vunpack.c.l.b16 %v315
    %v835 = vunpack.c.l.b16 %v316
    %v836 = vunpack.c.l.b16 %v317
    %v837 = vunpack.c.l.b16 %v318
    %v838 = vunpack.c.l.b16 %v319
    %v839 = vunpack.c.l.b16 %v320
    %v840 = vunpack.c.l.b16 %v321
    %v841 = vunpack.c.l.b16 %v322
    %v842 = vunpack.c.l.b16 %v323
    %v843 = vunpack.c.l.b16 %v324
    %v844 = vunpack.c.l.b16 %v325
    %v845 = vunpack.c.l.b16 %v326
    %v846 = vunpack.c.l.b16 %v327
    %v847 = vunpack.c.l.b16 %v328
    %v848 = vunpack.c.l.b16 %v329
    %v849 = vunpack.c.l.b16 %v330
    %v850 = vunpack.c.l.b16 %v331
    %v851 = vunpack.c.l.b16 %v332
    %v852 = vunpack.c.l.b16 %v333
    %v853 = vunpack.c.l.b16 %v334
    %v854 = vunpack.c.l.b16 %v335
    %v855 = vunpack.c.l.b16 %v336
    %v856 = vunpack.c.l.b16 %v337
    %v857 = vunpack.c.l.b16 %v338
    %v858 = vunpack.c.l.b16 %v339
    %v859 = vunpack.c.l.b16 %v340
    %v860 = vunpack.c.l.b16 %v341
    %v861 = vunpack.c.l.b16 %v342
    %v862 = vunpack.c.l.b16 %v343
    %v863 = vunpack.c.l.b16 %v344
    %v864 = vunpack.c.l.b16 %v345
    %v865 = vunpack.c.l.b16 %v346
    %v866 = vunpack.c.l.b16 %v347
    %v867 = vunpack.c.l.b16 %v348
    %v868 = vunpack.c.l.b16 %v349
    %v869 = vunpack.c.l.b16 %v350
    %v870 = vunpack.c.l.b16 %v351
    %v871 = vunpack.c.l.b16 %v352
    %v872 = vunpack.c.l.b16 %v353
    %v873 = vunpack.c.l.b16 %v354
    %v874 = vunpack.c.l.b16 %v355
    %v875 = vpack.c.b16 %v620, %v619
    %v876 = vpack.c.b16 %v622, %v621
    %v877 = vpack.c.b16 %v624, %v623
    %v878 = vpack.c.b16 %v626, %v625
    %v879 = vpack.c.b16 %v628, %v627
    %v880 = vpack.c.b16 %v630, %v629
    %v881 = vpack.c.b16 %v632, %v631
    %v882 = vpack.c.b16 %v634, %v633
    %v883 = vpack.c.b16 %v636, %v635
    %v884 = vpack.c.b16 %v638, %v637
    %v885 = vpack.c.b16 %v640, %v639
    %v886 = vpack.c.b16 %v642, %v641
    %v887 = vpack.c.b16 %v644, %v643
    %v888 = vpack.c.b16 %v646, %v645
    %v889 = vpack.c.b16 %v648, %v647
    %v890 = vpack.c.b16 %v650, %v649
    %v891 = vpack.c.b16 %v652, %v651
    %v892 = vpack.c.b16 %v654, %v653
    %v893 = vpack.c.b16 %v656, %v655
    %v894 = vpack.c.b16 %v658, %v657
    %v895 = vpack.c.b16 %v660, %v659
    %v896 = vpack.c.b16 %v662, %v661
    %v897 = vpack.c.b16 %v664, %v663
    %v898 = vpack.c.b16 %v666, %v665
    %v899 = vpack.c.b16 %v668, %v667
    %v900 = vpack.c.b16 %v670, %v669
    %v901 = vpack.c.b16 %v672, %v671
    %v902 = vpack.c.b16 %v674, %v673
    %v903 = vpack.c.b16 %v676, %v675
    %v904 = vpack.c.b16 %v678, %v677
    %v905 = vpack.c.b16 %v680, %v679
    %v906 = vpack.c.b16 %v682, %v681
    %v907 = vpack.c.b16 %v684, %v683
    %v908 = vpack.c.b16 %v686, %v685
    %v909 = vpack.c.b16 %v688, %v687
    %v910 = vpack.c.b16 %v690, %v689
    %v911 = vpack.c.b16 %v692, %v691
    %v912 = vpack.c.b16 %v694, %v693
    %v913 = vpack.c.b16 %v696, %v695
    %v914 = vpack.c.b16 %v698, %v697
    %v915 = vpack.c.b16 %v700, %v699
    %v916 = vpack.c.b16 %v702, %v701
    %v917 = vpack.c.b16 %v704, %v703
    %v918 = vpack.c.b16 %v706, %v705
    %v919 = vpack.c.b16 %v708, %v707
    %v920 = vpack.c.b16 %v710, %v709
    %v921 = vpack.c.b16 %v712, %v711
    %v922 = vpack.c.b16 %v714, %v713
    %v923 = vpack.c.b16 %v716, %v715
    %v924 = vpack.c.b16 %v718, %v717
    %v925 = vpack.c.b16 %v720, %v719
    %v926 = vpack.c.b16 %v722, %v721
    %v927 = vpack.c.b16 %v724, %v723
    %v928 = vpack.c.b16 %v726, %v725
    %v929 = vpack.c.b16 %v728, %v727
    %v930 = vpack.c.b16 %v730, %v729
    %v931 = vpack.c.b16 %v732, %v731
    %v932 = vpack.c.b16 %v734, %v733
    %v933 = vpack.c.b16 %v736, %v735
    %v934 = vpack.c.b16 %v738, %v737
    %v935 = vpack.c.b16 %v740, %v739
    %v936 = vpack.c.b16 %v742, %v741
    %v937 = vpack.c.b16 %v744, %v743
    %v938 = vpack.c.b16 %v746, %v745
    %v939 = vpack.c.b16 %v748, %v747
    %v940 = vpack.c.b16 %v750, %v749
    %v941 = vpack.c.b16 %v752, %v751
    %v942 = vpack.c.b16 %v754, %v753
    %v943 = vpack.c.b16 %v756, %v755
    %v944 = vpack.c.b16 %v758, %v757
    %v945 = vpack.c.b16 %v760, %v759
    %v946 = vpack.c.b16 %v762, %v761
    %v947 = vpack.c.b16 %v764, %v763
    %v948 = vpack.c.b16 %v766, %v765
    %v949 = vpack.c.b16 %v768, %v767
    %v950 = vpack.c.b16 %v770, %v769
    %v951 = vpack.c.b16 %v772, %v771
    %v952 = vpack.c.b16 %v774, %v773
    %v953 = vpack.c.b16 %v776, %v775
    %v954 = vpack.c.b16 %v778, %v777
    %v955 = vpack.c.b16 %v780, %v779
    %v956 = vpack.c.b16 %v782, %v781
    %v957 = vpack.c.b16 %v784, %v783
    %v958 = vpack.c.b16 %v786, %v785
    %v959 = vpack.c.b16 %v788, %v787
    %v960 = vpack.c.b16 %v790, %v789
    %v961 = vpack.c.b16 %v792, %v791
    %v962 = vpack.c.b16 %v794, %v793
    %v963 = vpack.c.b16 %v796, %v795
    %v964 = vpack.c.b16 %v798, %v797
    %v965 = vpack.c.b16 %v800, %v799
    %v966 = vpack.c.b16 %v802, %v801
    %v967 = vpack.c.b16 %v804, %v803
    %v968 = vpack.c.b16 %v806, %v805
    %v969 = vpack.c.b16 %v808, %v807
    %v970 = vpack.c.b16 %v810, %v809
    %v971 = vpack.c.b16 %v812, %v811
    %v972 = vpack.c.b16 %v814, %v813
    %v973 = vpack.c.b16 %v816, %v815
    %v974 = vpack.c.b16 %v818, %v817
    %v975 = vpack.c.b16 %v820, %v819
    %v976 = vpack.c.b16 %v822, %v821
    %v977 = vpack.c.b16 %v824, %v823
    %v978 = vpack.c.b16 %v826, %v825
    %v979 = vpack.c.b16 %v828, %v827
    %v980 = vpack.c.b16 %v830, %v829
    %v981 = vpack.c.b16 %v832, %v831
    %v982 = vpack.c.b16 %v834, %v833
    %v983 = vpack.c.b16 %v836, %v835
    %v984 = vpack.c.b16 %v838, %v837
    %v985 = vpack.c.b16 %v840, %v839
    %v986 = vpack.c.b16 %v842, %v841
    %v987 = vpack.c.b16 %v844, %v843
    %v988 = vpack.c.b16 %v846, %v845
    %v989 = vpack.c.b16 %v848, %v847
    %v990 = vpack.c.b16 %v850, %v849
    %v991 = vpack.c.b16 %v852, %v851
    %v992 = vpack.c.b16 %v854, %v853
    %v993 = vpack.c.b16 %v856, %v855
    %v994 = vpack.c.b16 %v858, %v857
    %v995 = vpack.c.b16 %v860, %v859
    %v996 = vpack.c.b16 %v862, %v861
    %v997 = vpack.c.b16 %v864, %v863
    %v998 = vpack.c.b16 %v866, %v865
    %v999 = vpack.c.b16 %v868, %v867
    %v1000 = vpack.c.b16 %v870, %v869
    %v1001 = vpack.c.b16 %v872, %v871
    %v1002 = vpack.c.b16 %v874, %v873
    %1131 = vmatprep.subr.bf16.mxu0 0
    %1132 = vmatpush1.bf16.msra.mxu0 %v875
    %1133 = vmatprep.subr.bf16.mxu0 0
    %1134 = vmatpush1.bf16.msra.mxu0 %v876
    %1135 = vmatprep.subr.bf16.mxu0 0
    %1136 = vmatpush1.bf16.msra.mxu0 %v877
    %1137 = vmatprep.subr.bf16.mxu0 0
    %1138 = vmatpush1.bf16.msra.mxu0 %v878
    %1139 = vmatprep.subr.bf16.mxu0 0
    %1140 = vmatpush1.bf16.msra.mxu0 %v879
    %1141 = vmatprep.subr.bf16.mxu0 0
    %1142 = vmatpush1.bf16.msra.mxu0 %v880
    %1143 = vmatprep.subr.bf16.mxu0 0
    %1144 = vmatpush1.bf16.msra.mxu0 %v881
    %1145 = vmatprep.subr.bf16.mxu0 0
    %1146 = vmatpush1.bf16.msra.mxu0 %v882
    %1147 = vmatprep.subr.bf16.mxu0 0
    %1148 = vmatpush1.bf16.msra.mxu0 %v883
    %1149 = vmatprep.subr.bf16.mxu0 0
    %1150 = vmatpush1.bf16.msra.mxu0 %v884
    %1151 = vmatprep.subr.bf16.mxu0 0
    %1152 = vmatpush1.bf16.msra.mxu0 %v885
    %1153 = vmatprep.subr.bf16.mxu0 0
    %1154 = vmatpush1.bf16.msra.mxu0 %v886
    %1155 = vmatprep.subr.bf16.mxu0 0
    %1156 = vmatpush1.bf16.msra.mxu0 %v887
    %1157 = vmatprep.subr.bf16.mxu0 0
    %1158 = vmatpush1.bf16.msra.mxu0 %v888
    %1159 = vmatprep.subr.bf16.mxu0 0
    %1160 = vmatpush1.bf16.msra.mxu0 %v889
    %1161 = vmatprep.subr.bf16.mxu0 0
    %1162 = vmatpush1.bf16.msra.mxu0 %v890
    %1163 = vmatprep.mubr.bf16.mxu0 %v85
    %1164 = vmatmul.mubr.bf16.gmra.mrb[0].mxu0 %v84
    %v1165 = vpop.f32.mrb[0].mxu0
    %v1166 = vadd.f32 %v361, %v1165
    %v1167 = vpop.f32.mrb[0].mxu0
    %v1168 = vpop.f32.mrb[0].mxu0
    %v1169 = vpop.f32.mrb[0].mxu0
    %1170 = vdwg.mxu0
    %1171 = vmatprep.subr.bf16.mxu0 0
    %1172 = vmatpush1.bf16.msra.mxu0 %v891
    %1173 = vmatprep.subr.bf16.mxu0 0
    %1174 = vmatpush1.bf16.msra.mxu0 %v892
    %1175 = vmatprep.subr.bf16.mxu0 0
    %1176 = vmatpush1.bf16.msra.mxu0 %v893
    %1177 = vmatprep.subr.bf16.mxu0 0
    %1178 = vmatpush1.bf16.msra.mxu0 %v894
    %1179 = vmatprep.subr.bf16.mxu0 0
    %1180 = vmatpush1.bf16.msra.mxu0 %v895
    %1181 = vmatprep.subr.bf16.mxu0 0
    %1182 = vmatpush1.bf16.msra.mxu0 %v896
    %1183 = vmatprep.subr.bf16.mxu0 0
    %1184 = vmatpush1.bf16.msra.mxu0 %v897
    %1185 = vmatprep.subr.bf16.mxu0 0
    %1186 = vmatpush1.bf16.msra.mxu0 %v898
    %1187 = vmatprep.subr.bf16.mxu0 0
    %1188 = vmatpush1.bf16.msra.mxu0 %v899
    %1189 = vmatprep.subr.bf16.mxu0 0
    %1190 = vmatpush1.bf16.msra.mxu0 %v900
    %1191 = vmatprep.subr.bf16.mxu0 0
    %1192 = vmatpush1.bf16.msra.mxu0 %v901
    %1193 = vmatprep.subr.bf16.mxu0 0
    %1194 = vmatpush1.bf16.msra.mxu0 %v902
    %1195 = vmatprep.subr.bf16.mxu0 0
    %1196 = vmatpush1.bf16.msra.mxu0 %v903
    %1197 = vmatprep.subr.bf16.mxu0 0
    %1198 = vmatpush1.bf16.msra.mxu0 %v904
    %1199 = vmatprep.subr.bf16.mxu0 0
    %1200 = vmatpush1.bf16.msra.mxu0 %v905
    %1201 = vmatprep.subr.bf16.mxu0 0
    %1202 = vmatpush1.bf16.msra.mxu0 %v906
    %1203 = vmatprep.mubr.bf16.mxu0 %v87
    %1204 = vmatmul.mubr.bf16.gmra.mrb[0].mxu0 %v86
    %v1205 = vpop.f32.mrb[0].mxu0
    %v1206 = vadd.f32 %v1166, %v1205
    %v1207 = vpop.f32.mrb[0].mxu0
    %v1208 = vpop.f32.mrb[0].mxu0
    %v1209 = vpop.f32.mrb[0].mxu0
    %1210 = vdwg.mxu0
    %1211 = vmatprep.subr.bf16.mxu0 0
    %1212 = vmatpush1.bf16.msra.mxu0 %v907
    %1213 = vmatprep.subr.bf16.mxu0 0
    %1214 = vmatpush1.bf16.msra.mxu0 %v908
    %1215 = vmatprep.subr.bf16.mxu0 0
    %1216 = vmatpush1.bf16.msra.mxu0 %v909
    %1217 = vmatprep.subr.bf16.mxu0 0
    %1218 = vmatpush1.bf16.msra.mxu0 %v910
    %1219 = vmatprep.subr.bf16.mxu0 0
    %1220 = vmatpush1.bf16.msra.mxu0 %v911
    %1221 = vmatprep.subr.bf16.mxu0 0
    %1222 = vmatpush1.bf16.msra.mxu0 %v912
    %1223 = vmatprep.subr.bf16.mxu0 0
    %1224 = vmatpush1.bf16.msra.mxu0 %v913
    %1225 = vmatprep.subr.bf16.mxu0 0
    %1226 = vmatpush1.bf16.msra.mxu0 %v914
    %1227 = vmatprep.subr.bf16.mxu0 0
    %1228 = vmatpush1.bf16.msra.mxu0 %v915
    %1229 = vmatprep.subr.bf16.mxu0 0
    %1230 = vmatpush1.bf16.msra.mxu0 %v916
    %1231 = vmatprep.subr.bf16.mxu0 0
    %1232 = vmatpush1.bf16.msra.mxu0 %v917
    %1233 = vmatprep.subr.bf16.mxu0 0
    %1234 = vmatpush1.bf16.msra.mxu0 %v918
    %1235 = vmatprep.subr.bf16.mxu0 0
    %1236 = vmatpush1.bf16.msra.mxu0 %v919
    %1237 = vmatprep.subr.bf16.mxu0 0
    %1238 = vmatpush1.bf16.msra.mxu0 %v920
    %1239 = vmatprep.subr.bf16.mxu0 0
    %1240 = vmatpush1.bf16.msra.mxu0 %v921
    %1241 = vmatprep.subr.bf16.mxu0 0
    %1242 = vmatpush1.bf16.msra.mxu0 %v922
    %1243 = vmatprep.mubr.bf16.mxu0 %v89
    %1244 = vmatmul.mubr.bf16.gmra.mrb[0].mxu0 %v88
    %v1245 = vpop.f32.mrb[0].mxu0
    %v1246 = vadd.f32 %v1206, %v1245
    %v1247 = vpop.f32.mrb[0].mxu0
    %v1248 = vpop.f32.mrb[0].mxu0
    %v1249 = vpop.f32.mrb[0].mxu0
    %1250 = vdwg.mxu0
    %1251 = vmatprep.subr.bf16.mxu0 0
    %1252 = vmatpush1.bf16.msra.mxu0 %v923
    %1253 = vmatprep.subr.bf16.mxu0 0
    %1254 = vmatpush1.bf16.msra.mxu0 %v924
    %1255 = vmatprep.subr.bf16.mxu0 0
    %1256 = vmatpush1.bf16.msra.mxu0 %v925
    %1257 = vmatprep.subr.bf16.mxu0 0
    %1258 = vmatpush1.bf16.msra.mxu0 %v926
    %1259 = vmatprep.subr.bf16.mxu0 0
    %1260 = vmatpush1.bf16.msra.mxu0 %v927
    %1261 = vmatprep.subr.bf16.mxu0 0
    %1262 = vmatpush1.bf16.msra.mxu0 %v928
    %1263 = vmatprep.subr.bf16.mxu0 0
    %1264 = vmatpush1.bf16.msra.mxu0 %v929
    %1265 = vmatprep.subr.bf16.mxu0 0
    %1266 = vmatpush1.bf16.msra.mxu0 %v930
    %1267 = vmatprep.subr.bf16.mxu0 0
    %1268 = vmatpush1.bf16.msra.mxu0 %v931
    %1269 = vmatprep.subr.bf16.mxu0 0
    %1270 = vmatpush1.bf16.msra.mxu0 %v932
    %1271 = vmatprep.subr.bf16.mxu0 0
    %1272 = vmatpush1.bf16.msra.mxu0 %v933
    %1273 = vmatprep.subr.bf16.mxu0 0
    %1274 = vmatpush1.bf16.msra.mxu0 %v934
    %1275 = vmatprep.subr.bf16.mxu0 0
    %1276 = vmatpush1.bf16.msra.mxu0 %v935
    %1277 = vmatprep.subr.bf16.mxu0 0
    %1278 = vmatpush1.bf16.msra.mxu0 %v936
    %1279 = vmatprep.subr.bf16.mxu0 0
    %1280 = vmatpush1.bf16.msra.mxu0 %v937
    %1281 = vmatprep.subr.bf16.mxu0 0
    %1282 = vmatpush1.bf16.msra.mxu0 %v938
    %1283 = vmatprep.mubr.bf16.mxu0 %v91
    %1284 = vmatmul.mubr.bf16.gmra.mrb[0].mxu0 %v90
    %v1285 = vpop.f32.mrb[0].mxu0
    %v1286 = vadd.f32 %v1246, %v1285
    %v1287 = vpop.f32.mrb[0].mxu0
    %v1288 = vpop.f32.mrb[0].mxu0
    %v1289 = vpop.f32.mrb[0].mxu0
    %1290 = vdwg.mxu0
    %1291 = vmatprep.subr.bf16.mxu0 0
    %1292 = vmatpush1.bf16.msra.mxu0 %v939
    %1293 = vmatprep.subr.bf16.mxu0 0
    %1294 = vmatpush1.bf16.msra.mxu0 %v940
    %1295 = vmatprep.subr.bf16.mxu0 0
    %1296 = vmatpush1.bf16.msra.mxu0 %v941
    %1297 = vmatprep.subr.bf16.mxu0 0
    %1298 = vmatpush1.bf16.msra.mxu0 %v942
    %1299 = vmatprep.subr.bf16.mxu0 0
    %1300 = vmatpush1.bf16.msra.mxu0 %v943
    %1301 = vmatprep.subr.bf16.mxu0 0
    %1302 = vmatpush1.bf16.msra.mxu0 %v944
    %1303 = vmatprep.subr.bf16.mxu0 0
    %1304 = vmatpush1.bf16.msra.mxu0 %v945
    %1305 = vmatprep.subr.bf16.mxu0 0
    %1306 = vmatpush1.bf16.msra.mxu0 %v946
    %1307 = vmatprep.subr.bf16.mxu0 0
    %1308 = vmatpush1.bf16.msra.mxu0 %v947
    %1309 = vmatprep.subr.bf16.mxu0 0
    %1310 = vmatpush1.bf16.msra.mxu0 %v948
    %1311 = vmatprep.subr.bf16.mxu0 0
    %1312 = vmatpush1.bf16.msra.mxu0 %v949
    %1313 = vmatprep.subr.bf16.mxu0 0
    %1314 = vmatpush1.bf16.msra.mxu0 %v950
    %1315 = vmatprep.subr.bf16.mxu0 0
    %1316 = vmatpush1.bf16.msra.mxu0 %v951
    %1317 = vmatprep.subr.bf16.mxu0 0
    %1318 = vmatpush1.bf16.msra.mxu0 %v952
    %1319 = vmatprep.subr.bf16.mxu0 0
    %1320 = vmatpush1.bf16.msra.mxu0 %v953
    %1321 = vmatprep.subr.bf16.mxu0 0
    %1322 = vmatpush1.bf16.msra.mxu0 %v954
    %1323 = vmatprep.mubr.bf16.mxu0 %v93
    %1324 = vmatmul.mubr.bf16.gmra.mrb[0].mxu0 %v92
    %v1325 = vpop.f32.mrb[0].mxu0
    %v1326 = vadd.f32 %v1286, %v1325
    %v1327 = vpop.f32.mrb[0].mxu0
    %v1328 = vpop.f32.mrb[0].mxu0
    %v1329 = vpop.f32.mrb[0].mxu0
    %1330 = vdwg.mxu0
    %1331 = vmatprep.subr.bf16.mxu0 0
    %1332 = vmatpush1.bf16.msra.mxu0 %v955
    %1333 = vmatprep.subr.bf16.mxu0 0
    %1334 = vmatpush1.bf16.msra.mxu0 %v956
    %1335 = vmatprep.subr.bf16.mxu0 0
    %1336 = vmatpush1.bf16.msra.mxu0 %v957
    %1337 = vmatprep.subr.bf16.mxu0 0
    %1338 = vmatpush1.bf16.msra.mxu0 %v958
    %1339 = vmatprep.subr.bf16.mxu0 0
    %1340 = vmatpush1.bf16.msra.mxu0 %v959
    %1341 = vmatprep.subr.bf16.mxu0 0
    %1342 = vmatpush1.bf16.msra.mxu0 %v960
    %1343 = vmatprep.subr.bf16.mxu0 0
    %1344 = vmatpush1.bf16.msra.mxu0 %v961
    %1345 = vmatprep.subr.bf16.mxu0 0
    %1346 = vmatpush1.bf16.msra.mxu0 %v962
    %1347 = vmatprep.subr.bf16.mxu0 0
    %1348 = vmatpush1.bf16.msra.mxu0 %v963
    %1349 = vmatprep.subr.bf16.mxu0 0
    %1350 = vmatpush1.bf16.msra.mxu0 %v964
    %1351 = vmatprep.subr.bf16.mxu0 0
    %1352 = vmatpush1.bf16.msra.mxu0 %v965
    %1353 = vmatprep.subr.bf16.mxu0 0
    %1354 = vmatpush1.bf16.msra.mxu0 %v966
    %1355 = vmatprep.subr.bf16.mxu0 0
    %1356 = vmatpush1.bf16.msra.mxu0 %v967
    %1357 = vmatprep.subr.bf16.mxu0 0
    %1358 = vmatpush1.bf16.msra.mxu0 %v968
    %1359 = vmatprep.subr.bf16.mxu0 0
    %1360 = vmatpush1.bf16.msra.mxu0 %v969
    %1361 = vmatprep.subr.bf16.mxu0 0
    %1362 = vmatpush1.bf16.msra.mxu0 %v970
    %1363 = vmatprep.mubr.bf16.mxu0 %v95
    %1364 = vmatmul.mubr.bf16.gmra.mrb[0].mxu0 %v94
    %v1365 = vpop.f32.mrb[0].mxu0
    %v1366 = vadd.f32 %v1326, %v1365
    %v1367 = vpop.f32.mrb[0].mxu0
    %v1368 = vpop.f32.mrb[0].mxu0
    %v1369 = vpop.f32.mrb[0].mxu0
    %1370 = vdwg.mxu0
    %1371 = vmatprep.subr.bf16.mxu0 0
    %1372 = vmatpush1.bf16.msra.mxu0 %v971
    %1373 = vmatprep.subr.bf16.mxu0 0
    %1374 = vmatpush1.bf16.msra.mxu0 %v972
    %1375 = vmatprep.subr.bf16.mxu0 0
    %1376 = vmatpush1.bf16.msra.mxu0 %v973
    %1377 = vmatprep.subr.bf16.mxu0 0
    %1378 = vmatpush1.bf16.msra.mxu0 %v974
    %1379 = vmatprep.subr.bf16.mxu0 0
    %1380 = vmatpush1.bf16.msra.mxu0 %v975
    %1381 = vmatprep.subr.bf16.mxu0 0
    %1382 = vmatpush1.bf16.msra.mxu0 %v976
    %1383 = vmatprep.subr.bf16.mxu0 0
    %1384 = vmatpush1.bf16.msra.mxu0 %v977
    %1385 = vmatprep.subr.bf16.mxu0 0
    %1386 = vmatpush1.bf16.msra.mxu0 %v978
    %1387 = vmatprep.subr.bf16.mxu0 0
    %1388 = vmatpush1.bf16.msra.mxu0 %v979
    %1389 = vmatprep.subr.bf16.mxu0 0
    %1390 = vmatpush1.bf16.msra.mxu0 %v980
    %1391 = vmatprep.subr.bf16.mxu0 0
    %1392 = vmatpush1.bf16.msra.mxu0 %v981
    %1393 = vmatprep.subr.bf16.mxu0 0
    %1394 = vmatpush1.bf16.msra.mxu0 %v982
    %1395 = vmatprep.subr.bf16.mxu0 0
    %1396 = vmatpush1.bf16.msra.mxu0 %v983
    %1397 = vmatprep.subr.bf16.mxu0 0
    %1398 = vmatpush1.bf16.msra.mxu0 %v984
    %1399 = vmatprep.subr.bf16.mxu0 0
    %1400 = vmatpush1.bf16.msra.mxu0 %v985
    %1401 = vmatprep.subr.bf16.mxu0 0
    %1402 = vmatpush1.bf16.msra.mxu0 %v986
    %1403 = vmatprep.mubr.bf16.mxu0 %v97
    %1404 = vmatmul.mubr.bf16.gmra.mrb[0].mxu0 %v96
    %v1405 = vpop.f32.mrb[0].mxu0
    %v1406 = vadd.f32 %v1366, %v1405
    %v1407 = vpop.f32.mrb[0].mxu0
    %v1408 = vpop.f32.mrb[0].mxu0
    %v1409 = vpop.f32.mrb[0].mxu0
    %1410 = vdwg.mxu0
    %1411 = vmatprep.subr.bf16.mxu0 0
    %1412 = vmatpush1.bf16.msra.mxu0 %v987
    %1413 = vmatprep.subr.bf16.mxu0 0
    %1414 = vmatpush1.bf16.msra.mxu0 %v988
    %1415 = vmatprep.subr.bf16.mxu0 0
    %1416 = vmatpush1.bf16.msra.mxu0 %v989
    %1417 = vmatprep.subr.bf16.mxu0 0
    %1418 = vmatpush1.bf16.msra.mxu0 %v990
    %1419 = vmatprep.subr.bf16.mxu0 0
    %1420 = vmatpush1.bf16.msra.mxu0 %v991
    %1421 = vmatprep.subr.bf16.mxu0 0
    %1422 = vmatpush1.bf16.msra.mxu0 %v992
    %1423 = vmatprep.subr.bf16.mxu0 0
    %1424 = vmatpush1.bf16.msra.mxu0 %v993
    %1425 = vmatprep.subr.bf16.mxu0 0
    %1426 = vmatpush1.bf16.msra.mxu0 %v994
    %1427 = vmatprep.subr.bf16.mxu0 0
    %1428 = vmatpush1.bf16.msra.mxu0 %v995
    %1429 = vmatprep.subr.bf16.mxu0 0
    %1430 = vmatpush1.bf16.msra.mxu0 %v996
    %1431 = vmatprep.subr.bf16.mxu0 0
    %1432 = vmatpush1.bf16.msra.mxu0 %v997
    %1433 = vmatprep.subr.bf16.mxu0 0
    %1434 = vmatpush1.bf16.msra.mxu0 %v998
    %1435 = vmatprep.subr.bf16.mxu0 0
    %1436 = vmatpush1.bf16.msra.mxu0 %v999
    %1437 = vmatprep.subr.bf16.mxu0 0
    %1438 = vmatpush1.bf16.msra.mxu0 %v1000
    %1439 = vmatprep.subr.bf16.mxu0 0
    %1440 = vmatpush1.bf16.msra.mxu0 %v1001
    %1441 = vmatprep.subr.bf16.mxu0 0
    %1442 = vmatpush1.bf16.msra.mxu0 %v1002
    %1443 = vmatprep.mubr.bf16.mxu0 %v99
    %1444 = vmatmul.mubr.bf16.gmra.mrb[0].mxu0 %v98
    %v1445 = vpop.f32.mrb[0].mxu0
    %v1446 = vadd.f32 %v1406, %v1445
    %v1447 = vpop.f32.mrb[0].mxu0
    %v1448 = vpop.f32.mrb[0].mxu0
    %v1449 = vpop.f32.mrb[0].mxu0
    %1450 = vdwg.mxu0
    %v1451 = vmax.f32 %v1446, 0.0
    %v1452 = vpack.c.bf16 %v1451, %v1451
    %v1453 = vld [vmem:[#allocation7] sm:$0xf]
    %v1454 = vld [vmem:[#allocation7 + $0x4] sm:$0xf]
    %v1455 = vld [vmem:[#allocation7 + $0x8] sm:$0xf]
    %v1456 = vld [vmem:[#allocation7 + $0xc] sm:$0xf]
    %v1457 = vld [vmem:[#allocation7 + $0x10] sm:$0xf]
    %v1458 = vld [vmem:[#allocation7 + $0x14] sm:$0xf]
    %v1459 = vld [vmem:[#allocation7 + $0x18] sm:$0xf]
    %v1460 = vld [vmem:[#allocation7 + $0x1c] sm:$0xf]
    %v1461 = vld [vmem:[#allocation7 + $0x20] sm:$0xf]
    %v1462 = vld [vmem:[#allocation7 + $0x24] sm:$0xf]
    %v1463 = vld [vmem:[#allocation7 + $0x28] sm:$0xf]
    %v1464 = vld [vmem:[#allocation7 + $0x2c] sm:$0xf]
    %v1465 = vld [vmem:[#allocation7 + $0x30] sm:$0xf]
    %v1466 = vld [vmem:[#allocation7 + $0x34] sm:$0xf]
    %v1467 = vld [vmem:[#allocation7 + $0x38] sm:$0xf]
    %v1468 = vld [vmem:[#allocation7 + $0x3c] sm:$0xf]
    %v1469 = vld [vmem:[%s4] sm:$0x1]
    %v1471 = vlaneseq
    %v1472 = vshrl.u32 %v1471, 7
    %v1473 = vsub.s32 0, %v1472
    %v1474 = vrot.slane %v1469, %v1473
    %v1492 = vunpack.c.l.b16 %v1453
    %v1493 = vunpack.c.l.b16 %v1454
    %v1494 = vunpack.c.l.b16 %v1455
    %v1495 = vunpack.c.l.b16 %v1456
    %v1496 = vunpack.c.l.b16 %v1457
    %v1497 = vunpack.c.l.b16 %v1458
    %v1498 = vunpack.c.l.b16 %v1459
    %v1499 = vunpack.c.l.b16 %v1460
    %v1500 = vunpack.c.l.b16 %v1461
    %v1501 = vunpack.c.l.b16 %v1462
    %v1502 = vunpack.c.l.b16 %v1463
    %v1503 = vunpack.c.l.b16 %v1464
    %v1504 = vunpack.c.l.b16 %v1465
    %v1505 = vunpack.c.l.b16 %v1466
    %v1506 = vunpack.c.l.b16 %v1467
    %v1507 = vunpack.c.l.b16 %v1468
    %v1508 = vpack.c.b16 %v1493, %v1492
    %v1509 = vpack.c.b16 %v1495, %v1494
    %v1510 = vpack.c.b16 %v1497, %v1496
    %v1511 = vpack.c.b16 %v1499, %v1498
    %v1512 = vpack.c.b16 %v1501, %v1500
    %v1513 = vpack.c.b16 %v1503, %v1502
    %v1514 = vpack.c.b16 %v1505, %v1504
    %v1515 = vpack.c.b16 %v1507, %v1506
    %1524 = vmatprep.subr.bf16.mxu0 0
    %1525 = vmatpush1.bf16.msra.mxu0 %v1508
    %1526 = vmatprep.subr.bf16.mxu0 0
    %1527 = vmatpush1.bf16.msra.mxu0 %v1509
    %1528 = vmatprep.subr.bf16.mxu0 0
    %1529 = vmatpush1.bf16.msra.mxu0 %v1510
    %1530 = vmatprep.subr.bf16.mxu0 0
    %1531 = vmatpush1.bf16.msra.mxu0 %v1511
    %1532 = vmatprep.subr.bf16.mxu0 0
    %1533 = vmatpush1.bf16.msra.mxu0 %v1512
    %1534 = vmatprep.subr.bf16.mxu0 0
    %1535 = vmatpush1.bf16.msra.mxu0 %v1513
    %1536 = vmatprep.subr.bf16.mxu0 0
    %1537 = vmatpush1.bf16.msra.mxu0 %v1514
    %1538 = vmatprep.subr.bf16.mxu0 0
    %1539 = vmatpush1.bf16.msra.mxu0 %v1515
    %1540 = vmatprep.subr.bf16.mxu0 0
    %1541 = vmatpush1.bf16.msra.mxu0 0
    %1542 = vmatprep.subr.bf16.mxu0 0
    %1543 = vmatpush1.bf16.msra.mxu0 0
    %1544 = vmatprep.subr.bf16.mxu0 0
    %1545 = vmatpush1.bf16.msra.mxu0 0
    %1546 = vmatprep.subr.bf16.mxu0 0
    %1547 = vmatpush1.bf16.msra.mxu0 0
    %1548 = vmatprep.subr.bf16.mxu0 0
    %1549 = vmatpush1.bf16.msra.mxu0 0
    %1550 = vmatprep.subr.bf16.mxu0 0
    %1551 = vmatpush1.bf16.msra.mxu0 0
    %1552 = vmatprep.subr.bf16.mxu0 0
    %1553 = vmatpush1.bf16.msra.mxu0 0
    %1554 = vmatprep.subr.bf16.mxu0 0
    %1555 = vmatpush1.bf16.msra.mxu0 0
    %1556 = vmatprep.mubr.bf16.mxu0 0
    %1557 = vmatmul.mubr.bf16.gmra.mrb[0].mxu0 %v1452
    %v1558 = vpop.f32.mrb[0].mxu0
    %v1559 = vadd.f32 %v1474, %v1558
    %v1560 = vpop.f32.mrb[0].mxu0
    %v1561 = vpop.f32.mrb[0].mxu0
    %v1562 = vpop.f32.mrb[0].mxu0
    %1563 = vdwg.mxu0
    %v1564 = vmax.f32 %v1559, 0.0
    %v1565 = vld [vmem:[%s5] sm:$0x1]
    %v1566 = vunpack.c.l.bf16 %v1565
    %v1567 = vlaneseq
    %v1568 = vshrl.u32 %v1567, 7
    %v1569 = vsub.s32 0, %v1568
    %v1570 = vrot.slane %v1566, %v1569
    %v1571 = vmul.f32 %v1564, %v1570
    %1572 = vadd.xlane.f32.xlu0 %v1571
    %v1573 = vpop.xlane.xlu0 %1572
    %v1574 = vld [vmem:[#allocation2] sm:$0x1]
    %v1576 = vlaneseq
    %v1577 = vshrl.u32 %v1576, 7
    %v1578 = vsub.s32 0, %v1577
    %v1579 = vrot.slane %v1574, %v1578
    %v1581 = vadd.f32 %v1573, %v1579
    %vm1582 = vcmask 7168
    %1583 = vst.msk [vmem:[%s7] sm:$0xff] %vm1582, %v1581
    // Predicated region
    $region42: #{tpu_custom_call.1} parent=1 // pred_check
      _
    $region43: #{tpu_custom_call.1} parent=1 // pred_check_branch
      %1585 = sbr.rel (0) target = $region45
    $region44: #{tpu_custom_call.1} parent=1 // pred_region
      _
    $region45: #{tpu_custom_call.1} parent=1 // pred_fallthru
      _
    // Predicated region
    $region46: #{tpu_custom_call.1} parent=1 // pred_check
      _
    $region47: #{tpu_custom_call.1} parent=1 // pred_check_branch
      %1587 = sbr.rel (0) target = $region49
    $region48: #{tpu_custom_call.1} parent=1 // pred_region
      _
    $region49: #{tpu_custom_call.1} parent=1 // pred_fallthru
      _
    %1588 = vsyncpa [#allocation4], 1
    %1589 = vsyncpa [#allocation6], 1

// kernel: tpu_custom_call.1
$region0: #{tpu_custom_call.1}
  #allocation0 [shape = 'u32[]', space=smem, size = 0x4, offset = 0x4, fixed_abs, tag = 'smem constant byte address 0x4 - core index']
  #allocation1 [shape = 'u32[144,128]{1,0:T(1,128)}', space=vmem, size = 0x12000, scoped, tag = 'internal scratch']
  #allocation2 [shape = 'f32[1,1]{1,0:T(1,128)S(1)}', space=vmem, size = 0x200, scoped, tag = 'scoped memory for tpu_custom_call.1']
  %s0 = inlined_call_operand.hbm [shape: f32[8,2048], index: 0, kind: input, shape index: {}]
  %s1 = inlined_call_operand.hbm [shape: bf16[2048,128], index: 1, kind: input, shape index: {}]
  %s2 = inlined_call_operand.vmem [shape: f32[1,128], index: 2, kind: input, shape index: {}]
  %s3 = inlined_call_operand.hbm [shape: bf16[128,128], index: 3, kind: input, shape index: {}]
  %s4 = inlined_call_operand.vmem [shape: f32[1,128], index: 4, kind: input, shape index: {}]
  %s5 = inlined_call_operand.vmem [shape: bf16[1,128], index: 5, kind: input, shape index: {}]
  %s6 = inlined_call_operand.<no memory space> [shape: f32[1,1], index: 6, kind: input, shape index: {}]
  %s7 = inlined_call_operand.vmem [shape: f32[8,1], index: 7, kind: output, shape index: {}]
  %s8 = sld [smem:[#allocation0]]
  $region50: #{tpu_custom_call.1} parent=0
    _
  %s10 = ssub.s32 1, %s8
  %s11 = scalar_select 0, %s10, %s8
  %v12 = vstv %s6
  %13 = vst [vmem:[#allocation2] sm:$0x1] %v12
  $region1: #{tpu_custom_call.1} parent=0
    #allocation3 [shape = 'u8[65536]{0}', space=vmem, size = 0x10000, scoped, tag = 'input window, operand 0, single buffered']
    #allocation4 [shape = 's32[1]{0}', space=sflag, size = 0x4, scoped, tag = 'scoped memory for tpu_custom_call.1']
    #allocation5 [shape = 'u8[524288]{0}', space=vmem, size = 0x80000, scoped, tag = 'input window, operand 1, single buffered']
    #allocation6 [shape = 's32[1]{0}', space=sflag, size = 0x4, scoped, tag = 'scoped memory for tpu_custom_call.1']
    #allocation7 [shape = 'u8[32768]{0}', space=vmem, size = 0x8000, scoped, tag = 'input window, operand 3, single buffered']
    %14 = vsyncpa [#allocation4], 0
    %15 = vsyncpa [#allocation6], 0
    // Predicated region
    $region2: #{tpu_custom_call.1} parent=1 // pred_check
      _
    $region3: #{tpu_custom_call.1} parent=1 // pred_check_branch
      %17 = sbr.rel (0) target = $region5
    $region4: #{tpu_custom_call.1} parent=1 // pred_region
      %s19 = ssub.s32 2048, 2048
      %20 = vsyncadd [#allocation4], %s19
      %s22 = sshll.u32 [#allocation3], 4
      %s23 = int_to_ptr.vmem [resolvable:$true] %s22
      %25 = dma.hbm_to_vmem [thread:$0]  %s0, 2048, %s23, [#allocation4]
    $region5: #{tpu_custom_call.1} parent=1 // pred_fallthru
      _
    // Predicated region
    $region6: #{tpu_custom_call.1} parent=1 // pred_check
      _
    $region7: #{tpu_custom_call.1} parent=1 // pred_check_branch
      %27 = sbr.rel (0) target = $region9
    $region8: #{tpu_custom_call.1} parent=1 // pred_region
      %s29 = ssub.s32 16384, 16384
      %30 = vsyncadd [#allocation6], %s29
      %s31 = sshll.u32 [#allocation5], 4
      %s32 = int_to_ptr.vmem [resolvable:$true] %s31
      %37 = dma.hbm_to_vmem [thread:$0]  %s1, 16384, %s32, [#allocation6], 64, 64, 4
    $region9: #{tpu_custom_call.1} parent=1 // pred_fallthru
      _
    // Predicated region
    $region10: #{tpu_custom_call.1} parent=1 // pred_check
      _
    $region11: #{tpu_custom_call.1} parent=1 // pred_check_branch
      %39 = sbr.rel (0) target = $region13
    $region12: #{tpu_custom_call.1} parent=1 // pred_region
      _
    $region13: #{tpu_custom_call.1} parent=1 // pred_fallthru
      _
    // Predicated region
    $region14: #{tpu_custom_call.1} parent=1 // pred_check
      _
    $region15: #{tpu_custom_call.1} parent=1 // pred_check_branch
      %41 = sbr.rel (0) target = $region17
    $region16: #{tpu_custom_call.1} parent=1 // pred_region
      %s43 = ssub.s32 1024, 1024
      %44 = vsyncadd [#allocation6], %s43
      %s45 = sshll.u32 [#allocation7], 4
      %s46 = int_to_ptr.vmem [resolvable:$true] %s45
      %51 = dma.hbm_to_vmem [thread:$0]  %s3, 1024, %s46, [#allocation6], 64, 64, 4
    $region17: #{tpu_custom_call.1} parent=1 // pred_fallthru
      _
    // Predicated region
    $region18: #{tpu_custom_call.1} parent=1 // pred_check
      _
    $region19: #{tpu_custom_call.1} parent=1 // pred_check_branch
      %53 = sbr.rel (0) target = $region21
    $region20: #{tpu_custom_call.1} parent=1 // pred_region
      _
    $region21: #{tpu_custom_call.1} parent=1 // pred_fallthru
      _
    // Predicated region
    $region22: #{tpu_custom_call.1} parent=1 // pred_check
      _
    $region23: #{tpu_custom_call.1} parent=1 // pred_check_branch
      %55 = sbr.rel (0) target = $region25
    $region24: #{tpu_custom_call.1} parent=1 // pred_region
      _
    $region25: #{tpu_custom_call.1} parent=1 // pred_fallthru
      _
    // Predicated region
    $region26: #{tpu_custom_call.1} parent=1 // pred_check
      _
    $region27: #{tpu_custom_call.1} parent=1 // pred_check_branch
      %57 = sbr.rel (0) target = $region29
    $region28: #{tpu_custom_call.1} parent=1 // pred_region
      _
    $region29: #{tpu_custom_call.1} parent=1 // pred_fallthru
      _
    // Predicated region
    $region30: #{tpu_custom_call.1} parent=1 // pred_check
      _
    $region31: #{tpu_custom_call.1} parent=1 // pred_check_branch
      %59 = sbr.rel (0) target = $region33
    $region32: #{tpu_custom_call.1} parent=1 // pred_region
      %60 = dma.done [#allocation4], 2048
    $region33: #{tpu_custom_call.1} parent=1 // pred_fallthru
      _
    // Predicated region
    $region34: #{tpu_custom_call.1} parent=1 // pred_check
      _
    $region35: #{tpu_custom_call.1} parent=1 // pred_check_branch
      %62 = sbr.rel (0) target = $region37
    $region36: #{tpu_custom_call.1} parent=1 // pred_region
      %63 = dma.done [#allocation6], 16384
    $region37: #{tpu_custom_call.1} parent=1 // pred_fallthru
      _
    // Predicated region
    $region38: #{tpu_custom_call.1} parent=1 // pred_check
      _
    $region39: #{tpu_custom_call.1} parent=1 // pred_check_branch
      %65 = sbr.rel (0) target = $region41
    $region40: #{tpu_custom_call.1} parent=1 // pred_region
      %66 = dma.done [#allocation6], 1024
    $region41: #{tpu_custom_call.1} parent=1 // pred_fallthru
      _
    %v68 = vld [vmem:[#allocation3] sm:$0xff]
    %v69 = vld [vmem:[#allocation3 + $0x8] sm:$0xff]
    %v70 = vld [vmem:[#allocation3 + $0x10] sm:$0xff]
    %v71 = vld [vmem:[#allocation3 + $0x18] sm:$0xff]
    %v72 = vld [vmem:[#allocation3 + $0x20] sm:$0xff]
    %v73 = vld [vmem:[#allocation3 + $0x28] sm:$0xff]
    %v74 = vld [vmem:[#allocation3 + $0x30] sm:$0xff]
    %v75 = vld [vmem:[#allocation3 + $0x38] sm:$0xff]
    %v76 = vld [vmem:[#allocation3 + $0x40] sm:$0xff]
    %v77 = vld [vmem:[#allocation3 + $0x48] sm:$0xff]
    %v78 = vld [vmem:[#allocation3 + $0x50] sm:$0xff]
    %v79 = vld [vmem:[#allocation3 + $0x58] sm:$0xff]
    %v80 = vld [vmem:[#allocation3 + $0x60] sm:$0xff]
    %v81 = vld [vmem:[#allocation3 + $0x68] sm:$0xff]
    %v82 = vld [vmem:[#allocation3 + $0x70] sm:$0xff]
    %v83 = vld [vmem:[#allocation3 + $0x78] sm:$0xff]
    %v84 = vpack.c.bf16 %v68, %v68
    %v85 = vpack.c.bf16 %v69, %v69
    %v86 = vpack.c.bf16 %v70, %v70
    %v87 = vpack.c.bf16 %v71, %v71
    %v88 = vpack.c.bf16 %v72, %v72
    %v89 = vpack.c.bf16 %v73, %v73
    %v90 = vpack.c.bf16 %v74, %v74
    %v91 = vpack.c.bf16 %v75, %v75
    %v92 = vpack.c.bf16 %v76, %v76
    %v93 = vpack.c.bf16 %v77, %v77
    %v94 = vpack.c.bf16 %v78, %v78
    %v95 = vpack.c.bf16 %v79, %v79
    %v96 = vpack.c.bf16 %v80, %v80
    %v97 = vpack.c.bf16 %v81, %v81
    %v98 = vpack.c.bf16 %v82, %v82
    %v99 = vpack.c.bf16 %v83, %v83
    %v100 = vld [vmem:[#allocation5] sm:$0xf]
    %v101 = vld [vmem:[#allocation5 + $0x4] sm:$0xf]
    %v102 = vld [vmem:[#allocation5 + $0x8] sm:$0xf]
    %v103 = vld [vmem:[#allocation5 + $0xc] sm:$0xf]
    %v104 = vld [vmem:[#allocation5 + $0x10] sm:$0xf]
    %v105 = vld [vmem:[#allocation5 + $0x14] sm:$0xf]
    %v106 = vld [vmem:[#allocation5 + $0x18] sm:$0xf]
    %v107 = vld [vmem:[#allocation5 + $0x1c] sm:$0xf]
    %v108 = vld [vmem:[#allocation5 + $0x20] sm:$0xf]
    %v109 = vld [vmem:[#allocation5 + $0x24] sm:$0xf]
    %v110 = vld [vmem:[#allocation5 + $0x28] sm:$0xf]
    %v111 = vld [vmem:[#allocation5 + $0x2c] sm:$0xf]
    %v112 = vld [vmem:[#allocation5 + $0x30] sm:$0xf]
    %v113 = vld [vmem:[#allocation5 + $0x34] sm:$0xf]
    %v114 = vld [vmem:[#allocation5 + $0x38] sm:$0xf]
    %v115 = vld [vmem:[#allocation5 + $0x3c] sm:$0xf]
    %v116 = vld [vmem:[#allocation5 + $0x40] sm:$0xf]
    %v117 = vld [vmem:[#allocation5 + $0x44] sm:$0xf]
    %v118 = vld [vmem:[#allocation5 + $0x48] sm:$0xf]
    %v119 = vld [vmem:[#allocation5 + $0x4c] sm:$0xf]
    %v120 = vld [vmem:[#allocation5 + $0x50] sm:$0xf]
    %v121 = vld [vmem:[#allocation5 + $0x54] sm:$0xf]
    %v122 = vld [vmem:[#allocation5 + $0x58] sm:$0xf]
    %v123 = vld [vmem:[#allocation5 + $0x5c] sm:$0xf]
    %v124 = vld [vmem:[#allocation5 + $0x60] sm:$0xf]
    %v125 = vld [vmem:[#allocation5 + $0x64] sm:$0xf]
    %v126 = vld [vmem:[#allocation5 + $0x68] sm:$0xf]
    %v127 = vld [vmem:[#allocation5 + $0x6c] sm:$0xf]
    %v128 = vld [vmem:[#allocation5 + $0x70] sm:$0xf]
    %v129 = vld [vmem:[#allocation5 + $0x74] sm:$0xf]
    %v130 = vld [vmem:[#allocation5 + $0x78] sm:$0xf]
    %v131 = vld [vmem:[#allocation5 + $0x7c] sm:$0xf]
    %v132 = vld [vmem:[#allocation5 + $0x80] sm:$0xf]
    %v133 = vld [vmem:[#allocation5 + $0x84] sm:$0xf]
    %v134 = vld [vmem:[#allocation5 + $0x88] sm:$0xf]
    %v135 = vld [vmem:[#allocation5 + $0x8c] sm:$0xf]
    %v136 = vld [vmem:[#allocation5 + $0x90] sm:$0xf]
    %v137 = vld [vmem:[#allocation5 + $0x94] sm:$0xf]
    %v138 = vld [vmem:[#allocation5 + $0x98] sm:$0xf]
    %v139 = vld [vmem:[#allocation5 + $0x9c] sm:$0xf]
    %v140 = vld [vmem:[#allocation5 + $0xa0] sm:$0xf]
    %v141 = vld [vmem:[#allocation5 + $0xa4] sm:$0xf]
    %v142 = vld [vmem:[#allocation5 + $0xa8] sm:$0xf]
    %v143 = vld [vmem:[#allocation5 + $0xac] sm:$0xf]
    %v144 = vld [vmem:[#allocation5 + $0xb0] sm:$0xf]
    %v145 = vld [vmem:[#allocation5 + $0xb4] sm:$0xf]
    %v146 = vld [vmem:[#allocation5 + $0xb8] sm:$0xf]
    %v147 = vld [vmem:[#allocation5 + $0xbc] sm:$0xf]
    %v148 = vld [vmem:[#allocation5 + $0xc0] sm:$0xf]
    %v149 = vld [vmem:[#allocation5 + $0xc4] sm:$0xf]
    %v150 = vld [vmem:[#allocation5 + $0xc8] sm:$0xf]
    %v151 = vld [vmem:[#allocation5 + $0xcc] sm:$0xf]
    %v152 = vld [vmem:[#allocation5 + $0xd0] sm:$0xf]
    %v153 = vld [vmem:[#allocation5 + $0xd4] sm:$0xf]
    %v154 = vld [vmem:[#allocation5 + $0xd8] sm:$0xf]
    %v155 = vld [vmem:[#allocation5 + $0xdc] sm:$0xf]
    %v156 = vld [vmem:[#allocation5 + $0xe0] sm:$0xf]
    %v157 = vld [vmem:[#allocation5 + $0xe4] sm:$0xf]
    %v158 = vld [vmem:[#allocation5 + $0xe8] sm:$0xf]
    %v159 = vld [vmem:[#allocation5 + $0xec] sm:$0xf]
    %v160 = vld [vmem:[#allocation5 + $0xf0] sm:$0xf]
    %v161 = vld [vmem:[#allocation5 + $0xf4] sm:$0xf]
    %v162 = vld [vmem:[#allocation5 + $0xf8] sm:$0xf]
    %v163 = vld [vmem:[#allocation5 + $0xfc] sm:$0xf]
    %v164 = vld [vmem:[#allocation5 + $0x100] sm:$0xf]
    %v165 = vld [vmem:[#allocation5 + $0x104] sm:$0xf]
    %v166 = vld [vmem:[#allocation5 + $0x108] sm:$0xf]
    %v167 = vld [vmem:[#allocation5 + $0x10c] sm:$0xf]
    %v168 = vld [vmem:[#allocation5 + $0x110] sm:$0xf]
    %v169 = vld [vmem:[#allocation5 + $0x114] sm:$0xf]
    %v170 = vld [vmem:[#allocation5 + $0x118] sm:$0xf]
    %v171 = vld [vmem:[#allocation5 + $0x11c] sm:$0xf]
    %v172 = vld [vmem:[#allocation5 + $0x120] sm:$0xf]
    %v173 = vld [vmem:[#allocation5 + $0x124] sm:$0xf]
    %v174 = vld [vmem:[#allocation5 + $0x128] sm:$0xf]
    %v175 = vld [vmem:[#allocation5 + $0x12c] sm:$0xf]
    %v176 = vld [vmem:[#allocation5 + $0x130] sm:$0xf]
    %v177 = vld [vmem:[#allocation5 + $0x134] sm:$0xf]
    %v178 = vld [vmem:[#allocation5 + $0x138] sm:$0xf]
    %v179 = vld [vmem:[#allocation5 + $0x13c] sm:$0xf]
    %v180 = vld [vmem:[#allocation5 + $0x140] sm:$0xf]
    %v181 = vld [vmem:[#allocation5 + $0x144] sm:$0xf]
    %v182 = vld [vmem:[#allocation5 + $0x148] sm:$0xf]
    %v183 = vld [vmem:[#allocation5 + $0x14c] sm:$0xf]
    %v184 = vld [vmem:[#allocation5 + $0x150] sm:$0xf]
    %v185 = vld [vmem:[#allocation5 + $0x154] sm:$0xf]
    %v186 = vld [vmem:[#allocation5 + $0x158] sm:$0xf]
    %v187 = vld [vmem:[#allocation5 + $0x15c] sm:$0xf]
    %v188 = vld [vmem:[#allocation5 + $0x160] sm:$0xf]
    %v189 = vld [vmem:[#allocation5 + $0x164] sm:$0xf]
    %v190 = vld [vmem:[#allocation5 + $0x168] sm:$0xf]
    %v191 = vld [vmem:[#allocation5 + $0x16c] sm:$0xf]
    %v192 = vld [vmem:[#allocation5 + $0x170] sm:$0xf]
    %v193 = vld [vmem:[#allocation5 + $0x174] sm:$0xf]
    %v194 = vld [vmem:[#allocation5 + $0x178] sm:$0xf]
    %v195 = vld [vmem:[#allocation5 + $0x17c] sm:$0xf]
    %v196 = vld [vmem:[#allocation5 + $0x180] sm:$0xf]
    %v197 = vld [vmem:[#allocation5 + $0x184] sm:$0xf]
    %v198 = vld [vmem:[#allocation5 + $0x188] sm:$0xf]
    %v199 = vld [vmem:[#allocation5 + $0x18c] sm:$0xf]
    %v200 = vld [vmem:[#allocation5 + $0x190] sm:$0xf]
    %v201 = vld [vmem:[#allocation5 + $0x194] sm:$0xf]
    %v202 = vld [vmem:[#allocation5 + $0x198] sm:$0xf]
    %v203 = vld [vmem:[#allocation5 + $0x19c] sm:$0xf]
    %v204 = vld [vmem:[#allocation5 + $0x1a0] sm:$0xf]
    %v205 = vld [vmem:[#allocation5 + $0x1a4] sm:$0xf]
    %v206 = vld [vmem:[#allocation5 + $0x1a8] sm:$0xf]
    %v207 = vld [vmem:[#allocation5 + $0x1ac] sm:$0xf]
    %v208 = vld [vmem:[#allocation5 + $0x1b0] sm:$0xf]
    %v209 = vld [vmem:[#allocation5 + $0x1b4] sm:$0xf]
    %v210 = vld [vmem:[#allocation5 + $0x1b8] sm:$0xf]
    %v211 = vld [vmem:[#allocation5 + $0x1bc] sm:$0xf]
    %v212 = vld [vmem:[#allocation5 + $0x1c0] sm:$0xf]
    %v213 = vld [vmem:[#allocation5 + $0x1c4] sm:$0xf]
    %v214 = vld [vmem:[#allocation5 + $0x1c8] sm:$0xf]
    %v215 = vld [vmem:[#allocation5 + $0x1cc] sm:$0xf]
    %v216 = vld [vmem:[#allocation5 + $0x1d0] sm:$0xf]
    %v217 = vld [vmem:[#allocation5 + $0x1d4] sm:$0xf]
    %v218 = vld [vmem:[#allocation5 + $0x1d8] sm:$0xf]
    %v219 = vld [vmem:[#allocation5 + $0x1dc] sm:$0xf]
    %v220 = vld [vmem:[#allocation5 + $0x1e0] sm:$0xf]
    %v221 = vld [vmem:[#allocation5 + $0x1e4] sm:$0xf]
    %v222 = vld [vmem:[#allocation5 + $0x1e8] sm:$0xf]
    %v223 = vld [vmem:[#allocation5 + $0x1ec] sm:$0xf]
    %v224 = vld [vmem:[#allocation5 + $0x1f0] sm:$0xf]
    %v225 = vld [vmem:[#allocation5 + $0x1f4] sm:$0xf]
    %v226 = vld [vmem:[#allocation5 + $0x1f8] sm:$0xf]
    %v227 = vld [vmem:[#allocation5 + $0x1fc] sm:$0xf]
    %v228 = vld [vmem:[#allocation5 + $0x200] sm:$0xf]
    %v229 = vld [vmem:[#allocation5 + $0x204] sm:$0xf]
    %v230 = vld [vmem:[#allocation5 + $0x208] sm:$0xf]
    %v231 = vld [vmem:[#allocation5 + $0x20c] sm:$0xf]
    %v232 = vld [vmem:[#allocation5 + $0x210] sm:$0xf]
    %v233 = vld [vmem:[#allocation5 + $0x214] sm:$0xf]
    %v234 = vld [vmem:[#allocation5 + $0x218] sm:$0xf]
    %v235 = vld [vmem:[#allocation5 + $0x21c] sm:$0xf]
    %v236 = vld [vmem:[#allocation5 + $0x220] sm:$0xf]
    %v237 = vld [vmem:[#allocation5 + $0x224] sm:$0xf]
    %v238 = vld [vmem:[#allocation5 + $0x228] sm:$0xf]
    %v239 = vld [vmem:[#allocation5 + $0x22c] sm:$0xf]
    %v240 = vld [vmem:[#allocation5 + $0x230] sm:$0xf]
    %v241 = vld [vmem:[#allocation5 + $0x234] sm:$0xf]
    %v242 = vld [vmem:[#allocation5 + $0x238] sm:$0xf]
    %v243 = vld [vmem:[#allocation5 + $0x23c] sm:$0xf]
    %v244 = vld [vmem:[#allocation5 + $0x240] sm:$0xf]
    %v245 = vld [vmem:[#allocation5 + $0x244] sm:$0xf]
    %v246 = vld [vmem:[#allocation5 + $0x248] sm:$0xf]
    %v247 = vld [vmem:[#allocation5 + $0x24c] sm:$0xf]
    %v248 = vld [vmem:[#allocation5 + $0x250] sm:$0xf]
    %v249 = vld [vmem:[#allocation5 + $0x254] sm:$0xf]
    %v250 = vld [vmem:[#allocation5 + $0x258] sm:$0xf]
    %v251 = vld [vmem:[#allocation5 + $0x25c] sm:$0xf]
    %v252 = vld [vmem:[#allocation5 + $0x260] sm:$0xf]
    %v253 = vld [vmem:[#allocation5 + $0x264] sm:$0xf]
    %v254 = vld [vmem:[#allocation5 + $0x268] sm:$0xf]
    %v255 = vld [vmem:[#allocation5 + $0x26c] sm:$0xf]
    %v256 = vld [vmem:[#allocation5 + $0x270] sm:$0xf]
    %v257 = vld [vmem:[#allocation5 + $0x274] sm:$0xf]
    %v258 = vld [vmem:[#allocation5 + $0x278] sm:$0xf]
    %v259 = vld [vmem:[#allocation5 + $0x27c] sm:$0xf]
    %v260 = vld [vmem:[#allocation5 + $0x280] sm:$0xf]
    %v261 = vld [vmem:[#allocation5 + $0x284] sm:$0xf]
    %v262 = vld [vmem:[#allocation5 + $0x288] sm:$0xf]
    %v263 = vld [vmem:[#allocation5 + $0x28c] sm:$0xf]
    %v264 = vld [vmem:[#allocation5 + $0x290] sm:$0xf]
    %v265 = vld [vmem:[#allocation5 + $0x294] sm:$0xf]
    %v266 = vld [vmem:[#allocation5 + $0x298] sm:$0xf]
    %v267 = vld [vmem:[#allocation5 + $0x29c] sm:$0xf]
    %v268 = vld [vmem:[#allocation5 + $0x2a0] sm:$0xf]
    %v269 = vld [vmem:[#allocation5 + $0x2a4] sm:$0xf]
    %v270 = vld [vmem:[#allocation5 + $0x2a8] sm:$0xf]
    %v271 = vld [vmem:[#allocation5 + $0x2ac] sm:$0xf]
    %v272 = vld [vmem:[#allocation5 + $0x2b0] sm:$0xf]
    %v273 = vld [vmem:[#allocation5 + $0x2b4] sm:$0xf]
    %v274 = vld [vmem:[#allocation5 + $0x2b8] sm:$0xf]
    %v275 = vld [vmem:[#allocation5 + $0x2bc] sm:$0xf]
    %v276 = vld [vmem:[#allocation5 + $0x2c0] sm:$0xf]
    %v277 = vld [vmem:[#allocation5 + $0x2c4] sm:$0xf]
    %v278 = vld [vmem:[#allocation5 + $0x2c8] sm:$0xf]
    %v279 = vld [vmem:[#allocation5 + $0x2cc] sm:$0xf]
    %v280 = vld [vmem:[#allocation5 + $0x2d0] sm:$0xf]
    %v281 = vld [vmem:[#allocation5 + $0x2d4] sm:$0xf]
    %v282 = vld [vmem:[#allocation5 + $0x2d8] sm:$0xf]
    %v283 = vld [vmem:[#allocation5 + $0x2dc] sm:$0xf]
    %v284 = vld [vmem:[#allocation5 + $0x2e0] sm:$0xf]
    %v285 = vld [vmem:[#allocation5 + $0x2e4] sm:$0xf]
    %v286 = vld [vmem:[#allocation5 + $0x2e8] sm:$0xf]
    %v287 = vld [vmem:[#allocation5 + $0x2ec] sm:$0xf]
    %v288 = vld [vmem:[#allocation5 + $0x2f0] sm:$0xf]
    %v289 = vld [vmem:[#allocation5 + $0x2f4] sm:$0xf]
    %v290 = vld [vmem:[#allocation5 + $0x2f8] sm:$0xf]
    %v291 = vld [vmem:[#allocation5 + $0x2fc] sm:$0xf]
    %v292 = vld [vmem:[#allocation5 + $0x300] sm:$0xf]
    %v293 = vld [vmem:[#allocation5 + $0x304] sm:$0xf]
    %v294 = vld [vmem:[#allocation5 + $0x308] sm:$0xf]
    %v295 = vld [vmem:[#allocation5 + $0x30c] sm:$0xf]
    %v296 = vld [vmem:[#allocation5 + $0x310] sm:$0xf]
    %v297 = vld [vmem:[#allocation5 + $0x314] sm:$0xf]
    %v298 = vld [vmem:[#allocation5 + $0x318] sm:$0xf]
    %v299 = vld [vmem:[#allocation5 + $0x31c] sm:$0xf]
    %v300 = vld [vmem:[#allocation5 + $0x320] sm:$0xf]
    %v301 = vld [vmem:[#allocation5 + $0x324] sm:$0xf]
    %v302 = vld [vmem:[#allocation5 + $0x328] sm:$0xf]
    %v303 = vld [vmem:[#allocation5 + $0x32c] sm:$0xf]
    %v304 = vld [vmem:[#allocation5 + $0x330] sm:$0xf]
    %v305 = vld [vmem:[#allocation5 + $0x334] sm:$0xf]
    %v306 = vld [vmem:[#allocation5 + $0x338] sm:$0xf]
    %v307 = vld [vmem:[#allocation5 + $0x33c] sm:$0xf]
    %v308 = vld [vmem:[#allocation5 + $0x340] sm:$0xf]
    %v309 = vld [vmem:[#allocation5 + $0x344] sm:$0xf]
    %v310 = vld [vmem:[#allocation5 + $0x348] sm:$0xf]
    %v311 = vld [vmem:[#allocation5 + $0x34c] sm:$0xf]
    %v312 = vld [vmem:[#allocation5 + $0x350] sm:$0xf]
    %v313 = vld [vmem:[#allocation5 + $0x354] sm:$0xf]
    %v314 = vld [vmem:[#allocation5 + $0x358] sm:$0xf]
    %v315 = vld [vmem:[#allocation5 + $0x35c] sm:$0xf]
    %v316 = vld [vmem:[#allocation5 + $0x360] sm:$0xf]
    %v317 = vld [vmem:[#allocation5 + $0x364] sm:$0xf]
    %v318 = vld [vmem:[#allocation5 + $0x368] sm:$0xf]
    %v319 = vld [vmem:[#allocation5 + $0x36c] sm:$0xf]
    %v320 = vld [vmem:[#allocation5 + $0x370] sm:$0xf]
    %v321 = vld [vmem:[#allocation5 + $0x374] sm:$0xf]
    %v322 = vld [vmem:[#allocation5 + $0x378] sm:$0xf]
    %v323 = vld [vmem:[#allocation5 + $0x37c] sm:$0xf]
    %v324 = vld [vmem:[#allocation5 + $0x380] sm:$0xf]
    %v325 = vld [vmem:[#allocation5 + $0x384] sm:$0xf]
    %v326 = vld [vmem:[#allocation5 + $0x388] sm:$0xf]
    %v327 = vld [vmem:[#allocation5 + $0x38c] sm:$0xf]
    %v328 = vld [vmem:[#allocation5 + $0x390] sm:$0xf]
    %v329 = vld [vmem:[#allocation5 + $0x394] sm:$0xf]
    %v330 = vld [vmem:[#allocation5 + $0x398] sm:$0xf]
    %v331 = vld [vmem:[#allocation5 + $0x39c] sm:$0xf]
    %v332 = vld [vmem:[#allocation5 + $0x3a0] sm:$0xf]
    %v333 = vld [vmem:[#allocation5 + $0x3a4] sm:$0xf]
    %v334 = vld [vmem:[#allocation5 + $0x3a8] sm:$0xf]
    %v335 = vld [vmem:[#allocation5 + $0x3ac] sm:$0xf]
    %v336 = vld [vmem:[#allocation5 + $0x3b0] sm:$0xf]
    %v337 = vld [vmem:[#allocation5 + $0x3b4] sm:$0xf]
    %v338 = vld [vmem:[#allocation5 + $0x3b8] sm:$0xf]
    %v339 = vld [vmem:[#allocation5 + $0x3bc] sm:$0xf]
    %v340 = vld [vmem:[#allocation5 + $0x3c0] sm:$0xf]
    %v341 = vld [vmem:[#allocation5 + $0x3c4] sm:$0xf]
    %v342 = vld [vmem:[#allocation5 + $0x3c8] sm:$0xf]
    %v343 = vld [vmem:[#allocation5 + $0x3cc] sm:$0xf]
    %v344 = vld [vmem:[#allocation5 + $0x3d0] sm:$0xf]
    %v345 = vld [vmem:[#allocation5 + $0x3d4] sm:$0xf]
    %v346 = vld [vmem:[#allocation5 + $0x3d8] sm:$0xf]
    %v347 = vld [vmem:[#allocation5 + $0x3dc] sm:$0xf]
    %v348 = vld [vmem:[#allocation5 + $0x3e0] sm:$0xf]
    %v349 = vld [vmem:[#allocation5 + $0x3e4] sm:$0xf]
    %v350 = vld [vmem:[#allocation5 + $0x3e8] sm:$0xf]
    %v351 = vld [vmem:[#allocation5 + $0x3ec] sm:$0xf]
    %v352 = vld [vmem:[#allocation5 + $0x3f0] sm:$0xf]
    %v353 = vld [vmem:[#allocation5 + $0x3f4] sm:$0xf]
    %v354 = vld [vmem:[#allocation5 + $0x3f8] sm:$0xf]
    %v355 = vld [vmem:[#allocation5 + $0x3fc] sm:$0xf]
    %v356 = vld [vmem:[%s2] sm:$0x1]
    %v358 = vlaneseq
    %v359 = vshrl.u32 %v358, 7
    %v360 = vsub.s32 0, %v359
    %v361 = vrot.slane %v356, %v360
    %v619 = vunpack.c.l.b16 %v100
    %v620 = vunpack.c.l.b16 %v101
    %v621 = vunpack.c.l.b16 %v102
    %v622 = vunpack.c.l.b16 %v103
    %v623 = vunpack.c.l.b16 %v104
    %v624 = vunpack.c.l.b16 %v105
    %v625 = vunpack.c.l.b16 %v106
    %v626 = vunpack.c.l.b16 %v107
    %v627 = vunpack.c.l.b16 %v108
    %v628 = vunpack.c.l.b16 %v109
    %v629 = vunpack.c.l.b16 %v110
    %v630 = vunpack.c.l.b16 %v111
    %v631 = vunpack.c.l.b16 %v112
    %v632 = vunpack.c.l.b16 %v113
    %v633 = vunpack.c.l.b16 %v114
    %v634 = vunpack.c.l.b16 %v115
    %v635 = vunpack.c.l.b16 %v116
    %v636 = vunpack.c.l.b16 %v117
    %v637 = vunpack.c.l.b16 %v118
    %v638 = vunpack.c.l.b16 %v119
    %v639 = vunpack.c.l.b16 %v120
    %v640 = vunpack.c.l.b16 %v121
    %v641 = vunpack.c.l.b16 %v122
    %v642 = vunpack.c.l.b16 %v123
    %v643 = vunpack.c.l.b16 %v124
    %v644 = vunpack.c.l.b16 %v125
    %v645 = vunpack.c.l.b16 %v126
    %v646 = vunpack.c.l.b16 %v127
    %v647 = vunpack.c.l.b16 %v128
    %v648 = vunpack.c.l.b16 %v129
    %v649 = vunpack.c.l.b16 %v130
    %v650 = vunpack.c.l.b16 %v131
    %v651 = vunpack.c.l.b16 %v132
    %v652 = vunpack.c.l.b16 %v133
    %v653 = vunpack.c.l.b16 %v134
    %v654 = vunpack.c.l.b16 %v135
    %v655 = vunpack.c.l.b16 %v136
    %v656 = vunpack.c.l.b16 %v137
    %v657 = vunpack.c.l.b16 %v138
    %v658 = vunpack.c.l.b16 %v139
    %v659 = vunpack.c.l.b16 %v140
    %v660 = vunpack.c.l.b16 %v141
    %v661 = vunpack.c.l.b16 %v142
    %v662 = vunpack.c.l.b16 %v143
    %v663 = vunpack.c.l.b16 %v144
    %v664 = vunpack.c.l.b16 %v145
    %v665 = vunpack.c.l.b16 %v146
    %v666 = vunpack.c.l.b16 %v147
    %v667 = vunpack.c.l.b16 %v148
    %v668 = vunpack.c.l.b16 %v149
    %v669 = vunpack.c.l.b16 %v150
    %v670 = vunpack.c.l.b16 %v151
    %v671 = vunpack.c.l.b16 %v152
    %v672 = vunpack.c.l.b16 %v153
    %v673 = vunpack.c.l.b16 %v154
    %v674 = vunpack.c.l.b16 %v155
    %v675 = vunpack.c.l.b16 %v156
    %v676 = vunpack.c.l.b16 %v157
    %v677 = vunpack.c.l.b16 %v158
    %v678 = vunpack.c.l.b16 %v159
    %v679 = vunpack.c.l.b16 %v160
    %v680 = vunpack.c.l.b16 %v161
    %v681 = vunpack.c.l.b16 %v162
    %v682 = vunpack.c.l.b16 %v163
    %v683 = vunpack.c.l.b16 %v164
    %v684 = vunpack.c.l.b16 %v165
    %v685 = vunpack.c.l.b16 %v166
    %v686 = vunpack.c.l.b16 %v167
    %v687 = vunpack.c.l.b16 %v168
    %v688 = vunpack.c.l.b16 %v169
    %v689 = vunpack.c.l.b16 %v170
    %v690 = vunpack.c.l.b16 %v171
    %v691 = vunpack.c.l.b16 %v172
    %v692 = vunpack.c.l.b16 %v173
    %v693 = vunpack.c.l.b16 %v174
    %v694 = vunpack.c.l.b16 %v175
    %v695 = vunpack.c.l.b16 %v176
    %v696 = vunpack.c.l.b16 %v177
    %v697 = vunpack.c.l.b16 %v178
    %v698 = vunpack.c.l.b16 %v179
    %v699 = vunpack.c.l.b16 %v180
    %v700 = vunpack.c.l.b16 %v181
    %v701 = vunpack.c.l.b16 %v182
    %v702 = vunpack.c.l.b16 %v183
    %v703 = vunpack.c.l.b16 %v184
    %v704 = vunpack.c.l.b16 %v185
    %v705 = vunpack.c.l.b16 %v186
    %v706 = vunpack.c.l.b16 %v187
    %v707 = vunpack.c.l.b16 %v188
    %v708 = vunpack.c.l.b16 %v189
    %v709 = vunpack.c.l.b16 %v190
    %v710 = vunpack.c.l.b16 %v191
    %v711 = vunpack.c.l.b16 %v192
    %v712 = vunpack.c.l.b16 %v193
    %v713 = vunpack.c.l.b16 %v194
    %v714 = vunpack.c.l.b16 %v195
    %v715 = vunpack.c.l.b16 %v196
    %v716 = vunpack.c.l.b16 %v197
    %v717 = vunpack.c.l.b16 %v198
    %v718 = vunpack.c.l.b16 %v199
    %v719 = vunpack.c.l.b16 %v200
    %v720 = vunpack.c.l.b16 %v201
    %v721 = vunpack.c.l.b16 %v202
    %v722 = vunpack.c.l.b16 %v203
    %v723 = vunpack.c.l.b16 %v204
    %v724 = vunpack.c.l.b16 %v205
    %v725 = vunpack.c.l.b16 %v206
    %v726 = vunpack.c.l.b16 %v207
    %v727 = vunpack.c.l.b16 %v208
    %v728 = vunpack.c.l.b16 %v209
    %v729 = vunpack.c.l.b16 %v210
    %v730 = vunpack.c.l.b16 %v211
    %v731 = vunpack.c.l.b16 %v212
    %v732 = vunpack.c.l.b16 %v213
    %v733 = vunpack.c.l.b16 %v214
    %v734 = vunpack.c.l.b16 %v215
    %v735 = vunpack.c.l.b16 %v216
    %v736 = vunpack.c.l.b16 %v217
    %v737 = vunpack.c.l.b16 %v218
    %v738 = vunpack.c.l.b16 %v219
    %v739 = vunpack.c.l.b16 %v220
    %v740 = vunpack.c.l.b16 %v221
    %v741 = vunpack.c.l.b16 %v222
    %v742 = vunpack.c.l.b16 %v223
    %v743 = vunpack.c.l.b16 %v224
    %v744 = vunpack.c.l.b16 %v225
    %v745 = vunpack.c.l.b16 %v226
    %v746 = vunpack.c.l.b16 %v227
    %v747 = vunpack.c.l.b16 %v228
    %v748 = vunpack.c.l.b16 %v229
    %v749 = vunpack.c.l.b16 %v230
    %v750 = vunpack.c.l.b16 %v231
    %v751 = vunpack.c.l.b16 %v232
    %v752 = vunpack.c.l.b16 %v233
    %v753 = vunpack.c.l.b16 %v234
    %v754 = vunpack.c.l.b16 %v235
    %v755 = vunpack.c.l.b16 %v236
    %v756 = vunpack.c.l.b16 %v237
    %v757 = vunpack.c.l.b16 %v238
    %v758 = vunpack.c.l.b16 %v239
    %v759 = vunpack.c.l.b16 %v240
    %v760 = vunpack.c.l.b16 %v241
    %v761 = vunpack.c.l.b16 %v242
    %v762 = vunpack.c.l.b16 %v243
    %v763 = vunpack.c.l.b16 %v244
    %v764 = vunpack.c.l.b16 %v245
    %v765 = vunpack.c.l.b16 %v246
    %v766 = vunpack.c.l.b16 %v247
    %v767 = vunpack.c.l.b16 %v248
    %v768 = vunpack.c.l.b16 %v249
    %v769 = vunpack.c.l.b16 %v250
    %v770 = vunpack.c.l.b16 %v251
    %v771 = vunpack.c.l.b16 %v252
    %v772 = vunpack.c.l.b16 %v253
    %v773 = vunpack.c.l.b16 %v254
    %v774 = vunpack.c.l.b16 %v255
    %v775 = vunpack.c.l.b16 %v256
    %v776 = vunpack.c.l.b16 %v257
    %v777 = vunpack.c.l.b16 %v258
    %v778 = vunpack.c.l.b16 %v259
    %v779 = vunpack.c.l.b16 %v260
    %v780 = vunpack.c.l.b16 %v261
    %v781 = vunpack.c.l.b16 %v262
    %v782 = vunpack.c.l.b16 %v263
    %v783 = vunpack.c.l.b16 %v264
    %v784 = vunpack.c.l.b16 %v265
    %v785 = vunpack.c.l.b16 %v266
    %v786 = vunpack.c.l.b16 %v267
    %v787 = vunpack.c.l.b16 %v268
    %v788 = vunpack.c.l.b16 %v269
    %v789 = vunpack.c.l.b16 %v270
    %v790 = vunpack.c.l.b16 %v271
    %v791 = vunpack.c.l.b16 %v272
    %v792 = vunpack.c.l.b16 %v273
    %v793 = vunpack.c.l.b16 %v274
    %v794 = vunpack.c.l.b16 %v275
    %v795 = vunpack.c.l.b16 %v276
    %v796 = vunpack.c.l.b16 %v277
    %v797 = vunpack.c.l.b16 %v278
    %v798 = vunpack.c.l.b16 %v279
    %v799 = vunpack.c.l.b16 %v280
    %v800 = vunpack.c.l.b16 %v281
    %v801 = vunpack.c.l.b16 %v282
    %v802 = vunpack.c.l.b16 %v283
    %v803 = vunpack.c.l.b16 %v284
    %v804 = vunpack.c.l.b16 %v285
    %v805 = vunpack.c.l.b16 %v286
    %v806 = vunpack.c.l.b16 %v287
    %v807 = vunpack.c.l.b16 %v288
    %v808 = vunpack.c.l.b16 %v289
    %v809 = vunpack.c.l.b16 %v290
    %v810 = vunpack.c.l.b16 %v291
    %v811 = vunpack.c.l.b16 %v292
    %v812 = vunpack.c.l.b16 %v293
    %v813 = vunpack.c.l.b16 %v294
    %v814 = vunpack.c.l.b16 %v295
    %v815 = vunpack.c.l.b16 %v296
    %v816 = vunpack.c.l.b16 %v297
    %v817 = vunpack.c.l.b16 %v298
    %v818 = vunpack.c.l.b16 %v299
    %v819 = vunpack.c.l.b16 %v300
    %v820 = vunpack.c.l.b16 %v301
    %v821 = vunpack.c.l.b16 %v302
    %v822 = vunpack.c.l.b16 %v303
    %v823 = vunpack.c.l.b16 %v304
    %v824 = vunpack.c.l.b16 %v305
    %v825 = vunpack.c.l.b16 %v306
    %v826 = vunpack.c.l.b16 %v307
    %v827 = vunpack.c.l.b16 %v308
    %v828 = vunpack.c.l.b16 %v309
    %v829 = vunpack.c.l.b16 %v310
    %v830 = vunpack.c.l.b16 %v311
    %v831 = vunpack.c.l.b16 %v312
    %v832 = vunpack.c.l.b16 %v313
    %v833 = vunpack.c.l.b16 %v314
    %v834 = vunpack.c.l.b16 %v315
    %v835 = vunpack.c.l.b16 %v316
    %v836 = vunpack.c.l.b16 %v317
    %v837 = vunpack.c.l.b16 %v318
    %v838 = vunpack.c.l.b16 %v319
    %v839 = vunpack.c.l.b16 %v320
    %v840 = vunpack.c.l.b16 %v321
    %v841 = vunpack.c.l.b16 %v322
    %v842 = vunpack.c.l.b16 %v323
    %v843 = vunpack.c.l.b16 %v324
    %v844 = vunpack.c.l.b16 %v325
    %v845 = vunpack.c.l.b16 %v326
    %v846 = vunpack.c.l.b16 %v327
    %v847 = vunpack.c.l.b16 %v328
    %v848 = vunpack.c.l.b16 %v329
    %v849 = vunpack.c.l.b16 %v330
    %v850 = vunpack.c.l.b16 %v331
    %v851 = vunpack.c.l.b16 %v332
    %v852 = vunpack.c.l.b16 %v333
    %v853 = vunpack.c.l.b16 %v334
    %v854 = vunpack.c.l.b16 %v335
    %v855 = vunpack.c.l.b16 %v336
    %v856 = vunpack.c.l.b16 %v337
    %v857 = vunpack.c.l.b16 %v338
    %v858 = vunpack.c.l.b16 %v339
    %v859 = vunpack.c.l.b16 %v340
    %v860 = vunpack.c.l.b16 %v341
    %v861 = vunpack.c.l.b16 %v342
    %v862 = vunpack.c.l.b16 %v343
    %v863 = vunpack.c.l.b16 %v344
    %v864 = vunpack.c.l.b16 %v345
    %v865 = vunpack.c.l.b16 %v346
    %v866 = vunpack.c.l.b16 %v347
    %v867 = vunpack.c.l.b16 %v348
    %v868 = vunpack.c.l.b16 %v349
    %v869 = vunpack.c.l.b16 %v350
    %v870 = vunpack.c.l.b16 %v351
    %v871 = vunpack.c.l.b16 %v352
    %v872 = vunpack.c.l.b16 %v353
    %v873 = vunpack.c.l.b16 %v354
    %v874 = vunpack.c.l.b16 %v355
    %v875 = vpack.c.b16 %v620, %v619
    %v876 = vpack.c.b16 %v622, %v621
    %v877 = vpack.c.b16 %v624, %v623
    %v878 = vpack.c.b16 %v626, %v625
    %v879 = vpack.c.b16 %v628, %v627
    %v880 = vpack.c.b16 %v630, %v629
    %v881 = vpack.c.b16 %v632, %v631
    %v882 = vpack.c.b16 %v634, %v633
    %v883 = vpack.c.b16 %v636, %v635
    %v884 = vpack.c.b16 %v638, %v637
    %v885 = vpack.c.b16 %v640, %v639
    %v886 = vpack.c.b16 %v642, %v641
    %v887 = vpack.c.b16 %v644, %v643
    %v888 = vpack.c.b16 %v646, %v645
    %v889 = vpack.c.b16 %v648, %v647
    %v890 = vpack.c.b16 %v650, %v649
    %v891 = vpack.c.b16 %v652, %v651
    %v892 = vpack.c.b16 %v654, %v653
    %v893 = vpack.c.b16 %v656, %v655
    %v894 = vpack.c.b16 %v658, %v657
    %v895 = vpack.c.b16 %v660, %v659
    %v896 = vpack.c.b16 %v662, %v661
    %v897 = vpack.c.b16 %v664, %v663
    %v898 = vpack.c.b16 %v666, %v665
    %v899 = vpack.c.b16 %v668, %v667
    %v900 = vpack.c.b16 %v670, %v669
    %v901 = vpack.c.b16 %v672, %v671
    %v902 = vpack.c.b16 %v674, %v673
    %v903 = vpack.c.b16 %v676, %v675
    %v904 = vpack.c.b16 %v678, %v677
    %v905 = vpack.c.b16 %v680, %v679
    %v906 = vpack.c.b16 %v682, %v681
    %v907 = vpack.c.b16 %v684, %v683
    %v908 = vpack.c.b16 %v686, %v685
    %v909 = vpack.c.b16 %v688, %v687
    %v910 = vpack.c.b16 %v690, %v689
    %v911 = vpack.c.b16 %v692, %v691
    %v912 = vpack.c.b16 %v694, %v693
    %v913 = vpack.c.b16 %v696, %v695
    %v914 = vpack.c.b16 %v698, %v697
    %v915 = vpack.c.b16 %v700, %v699
    %v916 = vpack.c.b16 %v702, %v701
    %v917 = vpack.c.b16 %v704, %v703
    %v918 = vpack.c.b16 %v706, %v705
    %v919 = vpack.c.b16 %v708, %v707
    %v920 = vpack.c.b16 %v710, %v709
    %v921 = vpack.c.b16 %v712, %v711
    %v922 = vpack.c.b16 %v714, %v713
    %v923 = vpack.c.b16 %v716, %v715
    %v924 = vpack.c.b16 %v718, %v717
    %v925 = vpack.c.b16 %v720, %v719
    %v926 = vpack.c.b16 %v722, %v721
    %v927 = vpack.c.b16 %v724, %v723
    %v928 = vpack.c.b16 %v726, %v725
    %v929 = vpack.c.b16 %v728, %v727
    %v930 = vpack.c.b16 %v730, %v729
    %v931 = vpack.c.b16 %v732, %v731
    %v932 = vpack.c.b16 %v734, %v733
    %v933 = vpack.c.b16 %v736, %v735
    %v934 = vpack.c.b16 %v738, %v737
    %v935 = vpack.c.b16 %v740, %v739
    %v936 = vpack.c.b16 %v742, %v741
    %v937 = vpack.c.b16 %v744, %v743
    %v938 = vpack.c.b16 %v746, %v745
    %v939 = vpack.c.b16 %v748, %v747
    %v940 = vpack.c.b16 %v750, %v749
    %v941 = vpack.c.b16 %v752, %v751
    %v942 = vpack.c.b16 %v754, %v753
    %v943 = vpack.c.b16 %v756, %v755
    %v944 = vpack.c.b16 %v758, %v757
    %v945 = vpack.c.b16 %v760, %v759
    %v946 = vpack.c.b16 %v762, %v761
    %v947 = vpack.c.b16 %v764, %v763
    %v948 = vpack.c.b16 %v766, %v765
    %v949 = vpack.c.b16 %v768, %v767
    %v950 = vpack.c.b16 %v770, %v769
    %v951 = vpack.c.b16 %v772, %v771
    %v952 = vpack.c.b16 %v774, %v773
    %v953 = vpack.c.b16 %v776, %v775
    %v954 = vpack.c.b16 %v778, %v777
    %v955 = vpack.c.b16 %v780, %v779
    %v956 = vpack.c.b16 %v782, %v781
    %v957 = vpack.c.b16 %v784, %v783
    %v958 = vpack.c.b16 %v786, %v785
    %v959 = vpack.c.b16 %v788, %v787
    %v960 = vpack.c.b16 %v790, %v789
    %v961 = vpack.c.b16 %v792, %v791
    %v962 = vpack.c.b16 %v794, %v793
    %v963 = vpack.c.b16 %v796, %v795
    %v964 = vpack.c.b16 %v798, %v797
    %v965 = vpack.c.b16 %v800, %v799
    %v966 = vpack.c.b16 %v802, %v801
    %v967 = vpack.c.b16 %v804, %v803
    %v968 = vpack.c.b16 %v806, %v805
    %v969 = vpack.c.b16 %v808, %v807
    %v970 = vpack.c.b16 %v810, %v809
    %v971 = vpack.c.b16 %v812, %v811
    %v972 = vpack.c.b16 %v814, %v813
    %v973 = vpack.c.b16 %v816, %v815
    %v974 = vpack.c.b16 %v818, %v817
    %v975 = vpack.c.b16 %v820, %v819
    %v976 = vpack.c.b16 %v822, %v821
    %v977 = vpack.c.b16 %v824, %v823
    %v978 = vpack.c.b16 %v826, %v825
    %v979 = vpack.c.b16 %v828, %v827
    %v980 = vpack.c.b16 %v830, %v829
    %v981 = vpack.c.b16 %v832, %v831
    %v982 = vpack.c.b16 %v834, %v833
    %v983 = vpack.c.b16 %v836, %v835
    %v984 = vpack.c.b16 %v838, %v837
    %v985 = vpack.c.b16 %v840, %v839
    %v986 = vpack.c.b16 %v842, %v841
    %v987 = vpack.c.b16 %v844, %v843
    %v988 = vpack.c.b16 %v846, %v845
    %v989 = vpack.c.b16 %v848, %v847
    %v990 = vpack.c.b16 %v850, %v849
    %v991 = vpack.c.b16 %v852, %v851
    %v992 = vpack.c.b16 %v854, %v853
    %v993 = vpack.c.b16 %v856, %v855
    %v994 = vpack.c.b16 %v858, %v857
    %v995 = vpack.c.b16 %v860, %v859
    %v996 = vpack.c.b16 %v862, %v861
    %v997 = vpack.c.b16 %v864, %v863
    %v998 = vpack.c.b16 %v866, %v865
    %v999 = vpack.c.b16 %v868, %v867
    %v1000 = vpack.c.b16 %v870, %v869
    %v1001 = vpack.c.b16 %v872, %v871
    %v1002 = vpack.c.b16 %v874, %v873
    %1131 = vmatprep.subr.bf16.mxu0 0
    %1132 = vmatpush1.bf16.msra.mxu0 %v875
    %1133 = vmatprep.subr.bf16.mxu0 0
    %1134 = vmatpush1.bf16.msra.mxu0 %v876
    %1135 = vmatprep.subr.bf16.mxu0 0
    %1136 = vmatpush1.bf16.msra.mxu0 %v877
    %1137 = vmatprep.subr.bf16.mxu0 0
    %1138 = vmatpush1.bf16.msra.mxu0 %v878
    %1139 = vmatprep.subr.bf16.mxu0 0
    %1140 = vmatpush1.bf16.msra.mxu0 %v879
    %1141 = vmatprep.subr.bf16.mxu0 0
    %1142 = vmatpush1.bf16.msra.mxu0 %v880
    %1143 = vmatprep.subr.bf16.mxu0 0
    %1144 = vmatpush1.bf16.msra.mxu0 %v881
    %1145 = vmatprep.subr.bf16.mxu0 0
    %1146 = vmatpush1.bf16.msra.mxu0 %v882
    %1147 = vmatprep.subr.bf16.mxu0 0
    %1148 = vmatpush1.bf16.msra.mxu0 %v883
    %1149 = vmatprep.subr.bf16.mxu0 0
    %1150 = vmatpush1.bf16.msra.mxu0 %v884
    %1151 = vmatprep.subr.bf16.mxu0 0
    %1152 = vmatpush1.bf16.msra.mxu0 %v885
    %1153 = vmatprep.subr.bf16.mxu0 0
    %1154 = vmatpush1.bf16.msra.mxu0 %v886
    %1155 = vmatprep.subr.bf16.mxu0 0
    %1156 = vmatpush1.bf16.msra.mxu0 %v887
    %1157 = vmatprep.subr.bf16.mxu0 0
    %1158 = vmatpush1.bf16.msra.mxu0 %v888
    %1159 = vmatprep.subr.bf16.mxu0 0
    %1160 = vmatpush1.bf16.msra.mxu0 %v889
    %1161 = vmatprep.subr.bf16.mxu0 0
    %1162 = vmatpush1.bf16.msra.mxu0 %v890
    %1163 = vmatprep.mubr.bf16.mxu0 %v85
    %1164 = vmatmul.mubr.bf16.gmra.mrb[0].mxu0 %v84
    %v1165 = vpop.f32.mrb[0].mxu0
    %v1166 = vadd.f32 %v361, %v1165
    %v1167 = vpop.f32.mrb[0].mxu0
    %v1168 = vpop.f32.mrb[0].mxu0
    %v1169 = vpop.f32.mrb[0].mxu0
    %1170 = vdwg.mxu0
    %1171 = vmatprep.subr.bf16.mxu0 0
    %1172 = vmatpush1.bf16.msra.mxu0 %v891
    %1173 = vmatprep.subr.bf16.mxu0 0
    %1174 = vmatpush1.bf16.msra.mxu0 %v892
    %1175 = vmatprep.subr.bf16.mxu0 0
    %1176 = vmatpush1.bf16.msra.mxu0 %v893
    %1177 = vmatprep.subr.bf16.mxu0 0
    %1178 = vmatpush1.bf16.msra.mxu0 %v894
    %1179 = vmatprep.subr.bf16.mxu0 0
    %1180 = vmatpush1.bf16.msra.mxu0 %v895
    %1181 = vmatprep.subr.bf16.mxu0 0
    %1182 = vmatpush1.bf16.msra.mxu0 %v896
    %1183 = vmatprep.subr.bf16.mxu0 0
    %1184 = vmatpush1.bf16.msra.mxu0 %v897
    %1185 = vmatprep.subr.bf16.mxu0 0
    %1186 = vmatpush1.bf16.msra.mxu0 %v898
    %1187 = vmatprep.subr.bf16.mxu0 0
    %1188 = vmatpush1.bf16.msra.mxu0 %v899
    %1189 = vmatprep.subr.bf16.mxu0 0
    %1190 = vmatpush1.bf16.msra.mxu0 %v900
    %1191 = vmatprep.subr.bf16.mxu0 0
    %1192 = vmatpush1.bf16.msra.mxu0 %v901
    %1193 = vmatprep.subr.bf16.mxu0 0
    %1194 = vmatpush1.bf16.msra.mxu0 %v902
    %1195 = vmatprep.subr.bf16.mxu0 0
    %1196 = vmatpush1.bf16.msra.mxu0 %v903
    %1197 = vmatprep.subr.bf16.mxu0 0
    %1198 = vmatpush1.bf16.msra.mxu0 %v904
    %1199 = vmatprep.subr.bf16.mxu0 0
    %1200 = vmatpush1.bf16.msra.mxu0 %v905
    %1201 = vmatprep.subr.bf16.mxu0 0
    %1202 = vmatpush1.bf16.msra.mxu0 %v906
    %1203 = vmatprep.mubr.bf16.mxu0 %v87
    %1204 = vmatmul.mubr.bf16.gmra.mrb[0].mxu0 %v86
    %v1205 = vpop.f32.mrb[0].mxu0
    %v1206 = vadd.f32 %v1166, %v1205
    %v1207 = vpop.f32.mrb[0].mxu0
    %v1208 = vpop.f32.mrb[0].mxu0
    %v1209 = vpop.f32.mrb[0].mxu0
    %1210 = vdwg.mxu0
    %1211 = vmatprep.subr.bf16.mxu0 0
    %1212 = vmatpush1.bf16.msra.mxu0 %v907
    %1213 = vmatprep.subr.bf16.mxu0 0
    %1214 = vmatpush1.bf16.msra.mxu0 %v908
    %1215 = vmatprep.subr.bf16.mxu0 0
    %1216 = vmatpush1.bf16.msra.mxu0 %v909
    %1217 = vmatprep.subr.bf16.mxu0 0
    %1218 = vmatpush1.bf16.msra.mxu0 %v910
    %1219 = vmatprep.subr.bf16.mxu0 0
    %1220 = vmatpush1.bf16.msra.mxu0 %v911
    %1221 = vmatprep.subr.bf16.mxu0 0
    %1222 = vmatpush1.bf16.msra.mxu0 %v912
    %1223 = vmatprep.subr.bf16.mxu0 0
    %1224 = vmatpush1.bf16.msra.mxu0 %v913
    %1225 = vmatprep.subr.bf16.mxu0 0
    %1226 = vmatpush1.bf16.msra.mxu0 %v914
    %1227 = vmatprep.subr.bf16.mxu0 0
    %1228 = vmatpush1.bf16.msra.mxu0 %v915
    %1229 = vmatprep.subr.bf16.mxu0 0
    %1230 = vmatpush1.bf16.msra.mxu0 %v916
    %1231 = vmatprep.subr.bf16.mxu0 0
    %1232 = vmatpush1.bf16.msra.mxu0 %v917
    %1233 = vmatprep.subr.bf16.mxu0 0
    %1234 = vmatpush1.bf16.msra.mxu0 %v918
    %1235 = vmatprep.subr.bf16.mxu0 0
    %1236 = vmatpush1.bf16.msra.mxu0 %v919
    %1237 = vmatprep.subr.bf16.mxu0 0
    %1238 = vmatpush1.bf16.msra.mxu0 %v920
    %1239 = vmatprep.subr.bf16.mxu0 0
    %1240 = vmatpush1.bf16.msra.mxu0 %v921
    %1241 = vmatprep.subr.bf16.mxu0 0
    %1242 = vmatpush1.bf16.msra.mxu0 %v922
    %1243 = vmatprep.mubr.bf16.mxu0 %v89
    %1244 = vmatmul.mubr.bf16.gmra.mrb[0].mxu0 %v88
    %v1245 = vpop.f32.mrb[0].mxu0
    %v1246 = vadd.f32 %v1206, %v1245
    %v1247 = vpop.f32.mrb[0].mxu0
    %v1248 = vpop.f32.mrb[0].mxu0
    %v1249 = vpop.f32.mrb[0].mxu0
    %1250 = vdwg.mxu0
    %1251 = vmatprep.subr.bf16.mxu0 0
    %1252 = vmatpush1.bf16.msra.mxu0 %v923
    %1253 = vmatprep.subr.bf16.mxu0 0
    %1254 = vmatpush1.bf16.msra.mxu0 %v924
    %1255 = vmatprep.subr.bf16.mxu0 0
    %1256 = vmatpush1.bf16.msra.mxu0 %v925
    %1257 = vmatprep.subr.bf16.mxu0 0
    %1258 = vmatpush1.bf16.msra.mxu0 %v926
    %1259 = vmatprep.subr.bf16.mxu0 0
    %1260 = vmatpush1.bf16.msra.mxu0 %v927
    %1261 = vmatprep.subr.bf16.mxu0 0
    %1262 = vmatpush1.bf16.msra.mxu0 %v928
    %1263 = vmatprep.subr.bf16.mxu0 0
    %1264 = vmatpush1.bf16.msra.mxu0 %v929
    %1265 = vmatprep.subr.bf16.mxu0 0
    %1266 = vmatpush1.bf16.msra.mxu0 %v930
    %1267 = vmatprep.subr.bf16.mxu0 0
    %1268 = vmatpush1.bf16.msra.mxu0 %v931
    %1269 = vmatprep.subr.bf16.mxu0 0
    %1270 = vmatpush1.bf16.msra.mxu0 %v932
    %1271 = vmatprep.subr.bf16.mxu0 0
    %1272 = vmatpush1.bf16.msra.mxu0 %v933
    %1273 = vmatprep.subr.bf16.mxu0 0
    %1274 = vmatpush1.bf16.msra.mxu0 %v934
    %1275 = vmatprep.subr.bf16.mxu0 0
    %1276 = vmatpush1.bf16.msra.mxu0 %v935
    %1277 = vmatprep.subr.bf16.mxu0 0
    %1278 = vmatpush1.bf16.msra.mxu0 %v936
    %1279 = vmatprep.subr.bf16.mxu0 0
    %1280 = vmatpush1.bf16.msra.mxu0 %v937
    %1281 = vmatprep.subr.bf16.mxu0 0
    %1282 = vmatpush1.bf16.msra.mxu0 %v938
    %1283 = vmatprep.mubr.bf16.mxu0 %v91
    %1284 = vmatmul.mubr.bf16.gmra.mrb[0].mxu0 %v90
    %v1285 = vpop.f32.mrb[0].mxu0
    %v1286 = vadd.f32 %v1246, %v1285
    %v1287 = vpop.f32.mrb[0].mxu0
    %v1288 = vpop.f32.mrb[0].mxu0
    %v1289 = vpop.f32.mrb[0].mxu0
    %1290 = vdwg.mxu0
    %1291 = vmatprep.subr.bf16.mxu0 0
    %1292 = vmatpush1.bf16.msra.mxu0 %v939
    %1293 = vmatprep.subr.bf16.mxu0 0
    %1294 = vmatpush1.bf16.msra.mxu0 %v940
    %1295 = vmatprep.subr.bf16.mxu0 0
    %1296 = vmatpush1.bf16.msra.mxu0 %v941
    %1297 = vmatprep.subr.bf16.mxu0 0
    %1298 = vmatpush1.bf16.msra.mxu0 %v942
    %1299 = vmatprep.subr.bf16.mxu0 0
    %1300 = vmatpush1.bf16.msra.mxu0 %v943
    %1301 = vmatprep.subr.bf16.mxu0 0
    %1302 = vmatpush1.bf16.msra.mxu0 %v944
    %1303 = vmatprep.subr.bf16.mxu0 0
    %1304 = vmatpush1.bf16.msra.mxu0 %v945
    %1305 = vmatprep.subr.bf16.mxu0 0
    %1306 = vmatpush1.bf16.msra.mxu0 %v946
    %1307 = vmatprep.subr.bf16.mxu0 0
    %1308 = vmatpush1.bf16.msra.mxu0 %v947
    %1309 = vmatprep.subr.bf16.mxu0 0
    %1310 = vmatpush1.bf16.msra.mxu0 %v948
    %1311 = vmatprep.subr.bf16.mxu0 0
    %1312 = vmatpush1.bf16.msra.mxu0 %v949
    %1313 = vmatprep.subr.bf16.mxu0 0
    %1314 = vmatpush1.bf16.msra.mxu0 %v950
    %1315 = vmatprep.subr.bf16.mxu0 0
    %1316 = vmatpush1.bf16.msra.mxu0 %v951
    %1317 = vmatprep.subr.bf16.mxu0 0
    %1318 = vmatpush1.bf16.msra.mxu0 %v952
    %1319 = vmatprep.subr.bf16.mxu0 0
    %1320 = vmatpush1.bf16.msra.mxu0 %v953
    %1321 = vmatprep.subr.bf16.mxu0 0
    %1322 = vmatpush1.bf16.msra.mxu0 %v954
    %1323 = vmatprep.mubr.bf16.mxu0 %v93
    %1324 = vmatmul.mubr.bf16.gmra.mrb[0].mxu0 %v92
    %v1325 = vpop.f32.mrb[0].mxu0
    %v1326 = vadd.f32 %v1286, %v1325
    %v1327 = vpop.f32.mrb[0].mxu0
    %v1328 = vpop.f32.mrb[0].mxu0
    %v1329 = vpop.f32.mrb[0].mxu0
    %1330 = vdwg.mxu0
    %1331 = vmatprep.subr.bf16.mxu0 0
    %1332 = vmatpush1.bf16.msra.mxu0 %v955
    %1333 = vmatprep.subr.bf16.mxu0 0
    %1334 = vmatpush1.bf16.msra.mxu0 %v956
    %1335 = vmatprep.subr.bf16.mxu0 0
    %1336 = vmatpush1.bf16.msra.mxu0 %v957
    %1337 = vmatprep.subr.bf16.mxu0 0
    %1338 = vmatpush1.bf16.msra.mxu0 %v958
    %1339 = vmatprep.subr.bf16.mxu0 0
    %1340 = vmatpush1.bf16.msra.mxu0 %v959
    %1341 = vmatprep.subr.bf16.mxu0 0
    %1342 = vmatpush1.bf16.msra.mxu0 %v960
    %1343 = vmatprep.subr.bf16.mxu0 0
    %1344 = vmatpush1.bf16.msra.mxu0 %v961
    %1345 = vmatprep.subr.bf16.mxu0 0
    %1346 = vmatpush1.bf16.msra.mxu0 %v962
    %1347 = vmatprep.subr.bf16.mxu0 0
    %1348 = vmatpush1.bf16.msra.mxu0 %v963
    %1349 = vmatprep.subr.bf16.mxu0 0
    %1350 = vmatpush1.bf16.msra.mxu0 %v964
    %1351 = vmatprep.subr.bf16.mxu0 0
    %1352 = vmatpush1.bf16.msra.mxu0 %v965
    %1353 = vmatprep.subr.bf16.mxu0 0
    %1354 = vmatpush1.bf16.msra.mxu0 %v966
    %1355 = vmatprep.subr.bf16.mxu0 0
    %1356 = vmatpush1.bf16.msra.mxu0 %v967
    %1357 = vmatprep.subr.bf16.mxu0 0
    %1358 = vmatpush1.bf16.msra.mxu0 %v968
    %1359 = vmatprep.subr.bf16.mxu0 0
    %1360 = vmatpush1.bf16.msra.mxu0 %v969
    %1361 = vmatprep.subr.bf16.mxu0 0
    %1362 = vmatpush1.bf16.msra.mxu0 %v970
    %1363 = vmatprep.mubr.bf16.mxu0 %v95
    %1364 = vmatmul.mubr.bf16.gmra.mrb[0].mxu0 %v94
    %v1365 = vpop.f32.mrb[0].mxu0
    %v1366 = vadd.f32 %v1326, %v1365
    %v1367 = vpop.f32.mrb[0].mxu0
    %v1368 = vpop.f32.mrb[0].mxu0
    %v1369 = vpop.f32.mrb[0].mxu0
    %1370 = vdwg.mxu0
    %1371 = vmatprep.subr.bf16.mxu0 0
    %1372 = vmatpush1.bf16.msra.mxu0 %v971
    %1373 = vmatprep.subr.bf16.mxu0 0
    %1374 = vmatpush1.bf16.msra.mxu0 %v972
    %1375 = vmatprep.subr.bf16.mxu0 0
    %1376 = vmatpush1.bf16.msra.mxu0 %v973
    %1377 = vmatprep.subr.bf16.mxu0 0
    %1378 = vmatpush1.bf16.msra.mxu0 %v974
    %1379 = vmatprep.subr.bf16.mxu0 0
    %1380 = vmatpush1.bf16.msra.mxu0 %v975
    %1381 = vmatprep.subr.bf16.mxu0 0
    %1382 = vmatpush1.bf16.msra.mxu0 %v976
    %1383 = vmatprep.subr.bf16.mxu0 0
    %1384 = vmatpush1.bf16.msra.mxu0 %v977
    %1385 = vmatprep.subr.bf16.mxu0 0
    %1386 = vmatpush1.bf16.msra.mxu0 %v978
    %1387 = vmatprep.subr.bf16.mxu0 0
    %1388 = vmatpush1.bf16.msra.mxu0 %v979
    %1389 = vmatprep.subr.bf16.mxu0 0
    %1390 = vmatpush1.bf16.msra.mxu0 %v980
    %1391 = vmatprep.subr.bf16.mxu0 0
    %1392 = vmatpush1.bf16.msra.mxu0 %v981
    %1393 = vmatprep.subr.bf16.mxu0 0
    %1394 = vmatpush1.bf16.msra.mxu0 %v982
    %1395 = vmatprep.subr.bf16.mxu0 0
    %1396 = vmatpush1.bf16.msra.mxu0 %v983
    %1397 = vmatprep.subr.bf16.mxu0 0
    %1398 = vmatpush1.bf16.msra.mxu0 %v984
    %1399 = vmatprep.subr.bf16.mxu0 0
    %1400 = vmatpush1.bf16.msra.mxu0 %v985
    %1401 = vmatprep.subr.bf16.mxu0 0
    %1402 = vmatpush1.bf16.msra.mxu0 %v986
    %1403 = vmatprep.mubr.bf16.mxu0 %v97
    %1404 = vmatmul.mubr.bf16.gmra.mrb[0].mxu0 %v96
    %v1405 = vpop.f32.mrb[0].mxu0
    %v1406 = vadd.f32 %v1366, %v1405
    %v1407 = vpop.f32.mrb[0].mxu0
    %v1408 = vpop.f32.mrb[0].mxu0
    %v1409 = vpop.f32.mrb[0].mxu0
    %1410 = vdwg.mxu0
    %1411 = vmatprep.subr.bf16.mxu0 0
    %1412 = vmatpush1.bf16.msra.mxu0 %v987
    %1413 = vmatprep.subr.bf16.mxu0 0
    %1414 = vmatpush1.bf16.msra.mxu0 %v988
    %1415 = vmatprep.subr.bf16.mxu0 0
    %1416 = vmatpush1.bf16.msra.mxu0 %v989
    %1417 = vmatprep.subr.bf16.mxu0 0
    %1418 = vmatpush1.bf16.msra.mxu0 %v990
    %1419 = vmatprep.subr.bf16.mxu0 0
    %1420 = vmatpush1.bf16.msra.mxu0 %v991
    %1421 = vmatprep.subr.bf16.mxu0 0
    %1422 = vmatpush1.bf16.msra.mxu0 %v992
    %1423 = vmatprep.subr.bf16.mxu0 0
    %1424 = vmatpush1.bf16.msra.mxu0 %v993
    %1425 = vmatprep.subr.bf16.mxu0 0
    %1426 = vmatpush1.bf16.msra.mxu0 %v994
    %1427 = vmatprep.subr.bf16.mxu0 0
    %1428 = vmatpush1.bf16.msra.mxu0 %v995
    %1429 = vmatprep.subr.bf16.mxu0 0
    %1430 = vmatpush1.bf16.msra.mxu0 %v996
    %1431 = vmatprep.subr.bf16.mxu0 0
    %1432 = vmatpush1.bf16.msra.mxu0 %v997
    %1433 = vmatprep.subr.bf16.mxu0 0
    %1434 = vmatpush1.bf16.msra.mxu0 %v998
    %1435 = vmatprep.subr.bf16.mxu0 0
    %1436 = vmatpush1.bf16.msra.mxu0 %v999
    %1437 = vmatprep.subr.bf16.mxu0 0
    %1438 = vmatpush1.bf16.msra.mxu0 %v1000
    %1439 = vmatprep.subr.bf16.mxu0 0
    %1440 = vmatpush1.bf16.msra.mxu0 %v1001
    %1441 = vmatprep.subr.bf16.mxu0 0
    %1442 = vmatpush1.bf16.msra.mxu0 %v1002
    %1443 = vmatprep.mubr.bf16.mxu0 %v99
    %1444 = vmatmul.mubr.bf16.gmra.mrb[0].mxu0 %v98
    %v1445 = vpop.f32.mrb[0].mxu0
    %v1446 = vadd.f32 %v1406, %v1445
    %v1447 = vpop.f32.mrb[0].mxu0
    %v1448 = vpop.f32.mrb[0].mxu0
    %v1449 = vpop.f32.mrb[0].mxu0
    %1450 = vdwg.mxu0
    %v1451 = vmax.f32 %v1446, 0.0
    %v1452 = vpack.c.bf16 %v1451, %v1451
    %v1453 = vld [vmem:[#allocation7] sm:$0xf]
    %v1454 = vld [vmem:[#allocation7 + $0x4] sm:$0xf]
    %v1455 = vld [vmem:[#allocation7 + $0x8] sm:$0xf]
    %v1456 = vld [vmem:[#allocation7 + $0xc] sm:$0xf]
    %v1457 = vld [vmem:[#allocation7 + $0x10] sm:$0xf]
    %v1458 = vld [vmem:[#allocation7 + $0x14] sm:$0xf]
    %v1459 = vld [vmem:[#allocation7 + $0x18] sm:$0xf]
    %v1460 = vld [vmem:[#allocation7 + $0x1c] sm:$0xf]
    %v1461 = vld [vmem:[#allocation7 + $0x20] sm:$0xf]
    %v1462 = vld [vmem:[#allocation7 + $0x24] sm:$0xf]
    %v1463 = vld [vmem:[#allocation7 + $0x28] sm:$0xf]
    %v1464 = vld [vmem:[#allocation7 + $0x2c] sm:$0xf]
    %v1465 = vld [vmem:[#allocation7 + $0x30] sm:$0xf]
    %v1466 = vld [vmem:[#allocation7 + $0x34] sm:$0xf]
    %v1467 = vld [vmem:[#allocation7 + $0x38] sm:$0xf]
    %v1468 = vld [vmem:[#allocation7 + $0x3c] sm:$0xf]
    %v1469 = vld [vmem:[%s4] sm:$0x1]
    %v1471 = vlaneseq
    %v1472 = vshrl.u32 %v1471, 7
    %v1473 = vsub.s32 0, %v1472
    %v1474 = vrot.slane %v1469, %v1473
    %v1492 = vunpack.c.l.b16 %v1453
    %v1493 = vunpack.c.l.b16 %v1454
    %v1494 = vunpack.c.l.b16 %v1455
    %v1495 = vunpack.c.l.b16 %v1456
    %v1496 = vunpack.c.l.b16 %v1457
    %v1497 = vunpack.c.l.b16 %v1458
    %v1498 = vunpack.c.l.b16 %v1459
    %v1499 = vunpack.c.l.b16 %v1460
    %v1500 = vunpack.c.l.b16 %v1461
    %v1501 = vunpack.c.l.b16 %v1462
    %v1502 = vunpack.c.l.b16 %v1463
    %v1503 = vunpack.c.l.b16 %v1464
    %v1504 = vunpack.c.l.b16 %v1465
    %v1505 = vunpack.c.l.b16 %v1466
    %v1506 = vunpack.c.l.b16 %v1467
    %v1507 = vunpack.c.l.b16 %v1468
    %v1508 = vpack.c.b16 %v1493, %v1492
    %v1509 = vpack.c.b16 %v1495, %v1494
    %v1510 = vpack.c.b16 %v1497, %v1496
    %v1511 = vpack.c.b16 %v1499, %v1498
    %v1512 = vpack.c.b16 %v1501, %v1500
    %v1513 = vpack.c.b16 %v1503, %v1502
    %v1514 = vpack.c.b16 %v1505, %v1504
    %v1515 = vpack.c.b16 %v1507, %v1506
    %1524 = vmatprep.subr.bf16.mxu0 0
    %1525 = vmatpush1.bf16.msra.mxu0 %v1508
    %1526 = vmatprep.subr.bf16.mxu0 0
    %1527 = vmatpush1.bf16.msra.mxu0 %v1509
    %1528 = vmatprep.subr.bf16.mxu0 0
    %1529 = vmatpush1.bf16.msra.mxu0 %v1510
    %1530 = vmatprep.subr.bf16.mxu0 0
    %1531 = vmatpush1.bf16.msra.mxu0 %v1511
    %1532 = vmatprep.subr.bf16.mxu0 0
    %1533 = vmatpush1.bf16.msra.mxu0 %v1512
    %1534 = vmatprep.subr.bf16.mxu0 0
    %1535 = vmatpush1.bf16.msra.mxu0 %v1513
    %1536 = vmatprep.subr.bf16.mxu0 0
    %1537 = vmatpush1.bf16.msra.mxu0 %v1514
    %1538 = vmatprep.subr.bf16.mxu0 0
    %1539 = vmatpush1.bf16.msra.mxu0 %v1515
    %1540 = vmatprep.subr.bf16.mxu0 0
    %1541 = vmatpush1.bf16.msra.mxu0 0
    %1542 = vmatprep.subr.bf16.mxu0 0
    %1543 = vmatpush1.bf16.msra.mxu0 0
    %1544 = vmatprep.subr.bf16.mxu0 0
    %1545 = vmatpush1.bf16.msra.mxu0 0
    %1546 = vmatprep.subr.bf16.mxu0 0
    %1547 = vmatpush1.bf16.msra.mxu0 0
    %1548 = vmatprep.subr.bf16.mxu0 0
    %1549 = vmatpush1.bf16.msra.mxu0 0
    %1550 = vmatprep.subr.bf16.mxu0 0
    %1551 = vmatpush1.bf16.msra.mxu0 0
    %1552 = vmatprep.subr.bf16.mxu0 0
    %1553 = vmatpush1.bf16.msra.mxu0 0
    %1554 = vmatprep.subr.bf16.mxu0 0
    %1555 = vmatpush1.bf16.msra.mxu0 0
    %1556 = vmatprep.mubr.bf16.mxu0 0
    %1557 = vmatmul.mubr.bf16.gmra.mrb[0].mxu0 %v1452
    %v1558 = vpop.f32.mrb[0].mxu0
    %v1559 = vadd.f32 %v1474, %v1558
    %v1560 = vpop.f32.mrb[0].mxu0
    %v1561 = vpop.f32.mrb[0].mxu0
    %v1562 = vpop.f32.mrb[0].mxu0
    %1563 = vdwg.mxu0
    %v1564 = vmax.f32 %v1559, 0.0
    %v1565 = vld [vmem:[%s5] sm:$0x1]
    %v1566 = vunpack.c.l.bf16 %v1565
    %v1567 = vlaneseq
    %v1568 = vshrl.u32 %v1567, 7
    %v1569 = vsub.s32 0, %v1568
    %v1570 = vrot.slane %v1566, %v1569
    %v1571 = vmul.f32 %v1564, %v1570
    %1572 = vadd.xlane.f32.xlu0 %v1571
    %v1573 = vpop.xlane.xlu0 %1572
    %v1574 = vld [vmem:[#allocation2] sm:$0x1]
    %v1576 = vlaneseq
    %v1577 = vshrl.u32 %v1576, 7
    %v1578 = vsub.s32 0, %v1577
    %v1579 = vrot.slane %v1574, %v1578
    %v1581 = vadd.f32 %v1573, %v1579
    %vm1582 = vcmask 7168
    %1583 = vst.msk [vmem:[%s7] sm:$0xff] %vm1582, %v1581
    // Predicated region
    $region42: #{tpu_custom_call.1} parent=1 // pred_check
      _
    $region43: #{tpu_custom_call.1} parent=1 // pred_check_branch
      %1585 = sbr.rel (0) target = $region45
    $region44: #{tpu_custom_call.1} parent=1 // pred_region
      _
    $region45: #{tpu_custom_call.1} parent=1 // pred_fallthru
      _
    // Predicated region
    $region46: #{tpu_custom_call.1} parent=1 // pred_check
      _
    $region47: #{tpu_custom_call.1} parent=1 // pred_check_branch
      %1587 = sbr.rel (0) target = $region49
    $region48: #{tpu_custom_call.1} parent=1 // pred_region
      _
    $region49: #{tpu_custom_call.1} parent=1 // pred_fallthru
      _
    %1588 = vsyncpa [#allocation4], 1
    %1589 = vsyncpa [#allocation6], 1

</llo_original>
